<compile_context>
chip_gen: v6e
topology: v6e:2x2x1
jax: 0.10.0
libtpu: 0.0.40
codegen_flags: <defaults>
</compile_context>

<pallas_src>
import functools

import jax
import jax.numpy as jnp
from jax.experimental import pallas as pl
from jax.experimental.pallas import tpu as pltpu


def _lstm_classify_kernel(x_ref,       # (T*B, D)    bf16, time-major flattened
                          wih0_ref,    # (D, 4H)     bf16
                          b0_ref,      # (1, 4H)     f32   (b_ih0 + b_hh0)
                          wfused_ref,  # (2H, 8H)    bf16  [[Whh0^T, Wih1^T],
                                       #                    [0,      Whh1^T]]
                          b1_ref,      # (1, 4H)     f32   (b_ih1 + b_hh1)
                          wfc_ref,     # (H, NCpad)  f32   (zero-padded lanes)
                          bfc_ref,     # (1, NCpad)  f32
                          out_ref,     # (B, NCpad)  f32
                          *, seq_len, batch, hidden):
    H = hidden
    B = batch
    bf16 = jnp.bfloat16

    # ---- hoisted: weights/biases stay resident for the whole recurrence ----
    wfused = wfused_ref[...]
    b1 = b1_ref[...]

    # ---- hoisted layer-0 input projection: one big MXU matmul + fused bias.
    # Kept as a traced value (no VMEM scratch; only a few vregs live).
    gin = (jnp.dot(x_ref[...], wih0_ref[...],
                   preferred_element_type=jnp.float32)
           + b0_ref[...])                                  # (T*B, 4H) f32

    def gate_math(g, c_prev):
        # One full-width sigmoid and one full-width tanh (lane-dense EUP
        # passes), then static lane slices in PyTorch gate order [i, f, g, o].
        s = jax.nn.sigmoid(g)
        t = jnp.tanh(g)
        i = s[:, 0 * H:1 * H]
        f = s[:, 1 * H:2 * H]
        gg = t[:, 2 * H:3 * H]
        o = s[:, 3 * H:4 * H]
        c_new = f * c_prev + i * gg
        h_new = o * jnp.tanh(c_new)
        return h_new, c_new

    zf = jnp.zeros((B, H), jnp.float32)
    c0 = zf
    c1 = zf
    h1_f32 = zf                                  # top-layer hidden (f32)
    h1_bf = jnp.zeros((B, H), bf16)              # matmul operand copy of h1
    rec0 = None                                  # h0_{t-1} @ Whh0^T (None => 0)
    g1part = None                                # layer-1 pre-act (no bias) of step t-1

    # Skewed, fully-unrolled recurrence: each iteration runs layer-0 gate of
    # step t and layer-1 gate of step t-1 (mutually independent), then one
    # fused matmul producing both next-step pre-activations.
    for t in range(seq_len):
        # ---- layer 0, step t ------------------------------------------------
        g0 = gin[t * B:(t + 1) * B, :]
        if rec0 is not None:
            g0 = g0 + rec0
        h0, c0 = gate_math(g0, c0)

        # ---- layer 1, step t-1 (off the layer-0 dependence chain) -----------
        if g1part is not None:
            h1_f32, c1 = gate_math(g1part + b1, c1)
            h1_bf = h1_f32.astype(bf16)

        # ---- fused recurrent matmul: [h0_t | h1_{t-1}] @ Wfused --------------
        lhs = jnp.concatenate([h0.astype(bf16), h1_bf], axis=-1)   # (B, 2H)
        m = jnp.dot(lhs, wfused, preferred_element_type=jnp.float32)  # (B, 8H)
        rec0 = m[:, 0:4 * H]           # layer-0 recurrence input for step t+1
        g1part = m[:, 4 * H:8 * H]     # layer-1 pre-activation for step t

    # ---- final layer-1 gate (step T-1) + classifier head (f32) --------------
    h1_f32, c1 = gate_math(g1part + b1, c1)
    out_ref[...] = (jnp.dot(h1_f32, wfc_ref[...],
                            preferred_element_type=jnp.float32)
                    + bfc_ref[...])


def lstm_classify_forward(x, params, *, hidden_size, num_classes):
    """x: (B, C, H, W) float32.  Returns logits (B, num_classes) float32."""
    B, C, H, W = x.shape
    D = C * W
    T = H
    HS = hidden_size

    # PyTorch: permute(0,2,3,1).reshape(B, H, W*C); then time-major & flatten.
    # (Pure layout plumbing — all compute happens inside the kernel.)
    x_seq = jnp.transpose(x, (0, 2, 3, 1)).reshape(B, T, D)
    x_tm = jnp.transpose(x_seq, (1, 0, 2)).reshape(T * B, D)

    (wih0, whh0, bih0, bhh0,
     wih1, whh1, bih1, bhh1,
     wfc, bfc) = params

    mm = jnp.bfloat16  # matmul-operand dtype; accumulation stays f32 in-kernel

    wih0_t = wih0.T.astype(mm)                                   # (D, 4H)
    b0 = (bih0 + bhh0).reshape(1, -1).astype(jnp.float32)        # (1, 4H)

    # Fused recurrent weight: [[Whh0^T, Wih1^T], [0, Whh1^T]]  -> (2H, 8H)
    wfused = jnp.concatenate([
        jnp.concatenate([whh0.T, wih1.T], axis=1),               # (H, 8H)
        jnp.concatenate([jnp.zeros((HS, 4 * HS), jnp.float32), whh1.T], axis=1),
    ], axis=0).astype(mm)                                        # (2H, 8H)
    b1 = (bih1 + bhh1).reshape(1, -1).astype(jnp.float32)        # (1, 4H)

    # Lane-padded classifier head (unmasked store; sliced back in the wrapper).
    nc_pad = max(128, ((num_classes + 127) // 128) * 128)
    wfc_p = jnp.zeros((HS, nc_pad), jnp.float32).at[:, :num_classes].set(
        wfc.T.astype(jnp.float32))                               # (H, NCpad)
    bfc_p = jnp.zeros((1, nc_pad), jnp.float32).at[:, :num_classes].set(
        bfc.reshape(1, -1).astype(jnp.float32))                  # (1, NCpad)

    x_mm = x_tm.astype(mm)                                       # (T*B, D)

    vmem = pl.BlockSpec(memory_space=pltpu.MemorySpace.VMEM)
    kernel = functools.partial(_lstm_classify_kernel,
                               seq_len=T, batch=B, hidden=HS)

    out_pad = pl.pallas_call(
        kernel,
        out_shape=jax.ShapeDtypeStruct((B, nc_pad), jnp.float32),
        in_specs=[vmem] * 7,
        out_specs=vmem,
    )(x_mm, wih0_t, b0, wfused, b1, wfc_p, bfc_p)

    return out_pad[:, :num_classes]


def init_params(key, input_size, hidden_size, num_classes):
    """Deterministic init mimicking PyTorch's uniform(-1/sqrt(H), 1/sqrt(H))."""
    ks = jax.random.split(key, 10)
    bound = 1.0 / jnp.sqrt(hidden_size)

    def u(k, shape):
        return jax.random.uniform(k, shape, jnp.float32, -bound, bound)

    wih0 = u(ks[0], (4 * hidden_size, input_size))
    whh0 = u(ks[1], (4 * hidden_size, hidden_size))
    bih0 = u(ks[2], (4 * hidden_size,))
    bhh0 = u(ks[3], (4 * hidden_size,))
    wih1 = u(ks[4], (4 * hidden_size, hidden_size))
    whh1 = u(ks[5], (4 * hidden_size, hidden_size))
    bih1 = u(ks[6], (4 * hidden_size,))
    bhh1 = u(ks[7], (4 * hidden_size,))
    wfc = u(ks[8], (num_classes, hidden_size))
    bfc = u(ks[9], (num_classes,))
    return (wih0, whh0, bih0, bhh0, wih1, whh1, bih1, bhh1, wfc, bfc)


def reference_forward(x, params, *, hidden_size, num_classes):
    """Pure-JAX f32 reference (exact PyTorch semantics) for correctness check."""
    B, C, H, W = x.shape
    x_seq = jnp.transpose(x, (0, 2, 3, 1)).reshape(B, H, C * W)
    (wih0, whh0, bih0, bhh0, wih1, whh1, bih1, bhh1, wfc, bfc) = params

    def cell(x_t, h, c, wih, whh, bih, bhh):
        g = x_t @ wih.T + bih + h @ whh.T + bhh
        i, f, gg, o = jnp.split(g, 4, axis=-1)
        c_new = jax.nn.sigmoid(f) * c + jax.nn.sigmoid(i) * jnp.tanh(gg)
        h_new = jax.nn.sigmoid(o) * jnp.tanh(c_new)
        return h_new, c_new

    h0 = jnp.zeros((B, hidden_size)); c0 = jnp.zeros((B, hidden_size))
    h1 = jnp.zeros((B, hidden_size)); c1 = jnp.zeros((B, hidden_size))
    for t in range(H):
        h0, c0 = cell(x_seq[:, t, :], h0, c0, wih0, whh0, bih0, bhh0)
        h1, c1 = cell(h0, h1, c1, wih1, whh1, bih1, bhh1)
    return h1 @ wfc.T + bfc


if __name__ == "__main__":
    # small shapes consistent with the module: input_shape=(C, H, W)=(4, 16, 16)
    B, C, H, W = 2, 4, 16, 16
    hidden_size = 32
    num_classes = 10
    input_size = C * W  # lstm_input_size = channels * width

    key = jax.random.PRNGKey(0)
    kx, kp = jax.random.split(key)
    x = jax.random.normal(kx, (B, C, H, W), jnp.float32)
    params = init_params(kp, input_size, hidden_size, num_classes)

    fwd = jax.jit(functools.partial(lstm_classify_forward,
                                    hidden_size=hidden_size,
                                    num_classes=num_classes))
    out = jax.block_until_ready(fwd(x, params))

    ref = reference_forward(x, params,
                            hidden_size=hidden_size,
                            num_classes=num_classes)
    assert out.shape == (B, num_classes)
    # bf16 matmul operands in the recurrence -> loosened tolerance vs f32 ref
    assert jnp.allclose(out, ref, atol=2e-2, rtol=2e-2), "mismatch vs JAX ref"

    print("KERNEL_OK")
</pallas_src>

<mosaic_0001>
module attributes {stable_mosaic.version = 11 : i64} {
  func.func @_lstm_classify_kernel(%arg0: memref<32x64xbf16, #tpu.memory_space<vmem>>, %arg1: memref<64x128xbf16, #tpu.memory_space<vmem>>, %arg2: memref<1x128xf32, #tpu.memory_space<vmem>>, %arg3: memref<64x256xbf16, #tpu.memory_space<vmem>>, %arg4: memref<1x128xf32, #tpu.memory_space<vmem>>, %arg5: memref<32x128xf32, #tpu.memory_space<vmem>>, %arg6: memref<1x128xf32, #tpu.memory_space<vmem>>, %arg7: memref<2x128xf32, #tpu.memory_space<vmem>>) attributes {dimension_semantics = [], scalar_prefetch = 0 : i64, scratch_operands = 0 : i64, tpu.core_type = #tpu.core_type<tc>} {
    %c0 = arith.constant 0 : index
    %c0_0 = arith.constant 0 : index
    %0 = vector.load %arg3[%c0, %c0_0] : memref<64x256xbf16, #tpu.memory_space<vmem>>, vector<64x256xbf16>
    %c0_1 = arith.constant 0 : index
    %c0_2 = arith.constant 0 : index
    %1 = vector.load %arg4[%c0_1, %c0_2] : memref<1x128xf32, #tpu.memory_space<vmem>>, vector<1x128xf32>
    %c0_3 = arith.constant 0 : index
    %c0_4 = arith.constant 0 : index
    %2 = vector.load %arg0[%c0_3, %c0_4] : memref<32x64xbf16, #tpu.memory_space<vmem>>, vector<32x64xbf16>
    %c0_5 = arith.constant 0 : index
    %c0_6 = arith.constant 0 : index
    %3 = vector.load %arg1[%c0_5, %c0_6] : memref<64x128xbf16, #tpu.memory_space<vmem>>, vector<64x128xbf16>
    %cst = arith.constant dense<0.000000e+00> : vector<32x128xf32>
    %4 = tpu.matmul %2, %3, %cst {dimension_numbers = #tpu.dot_dimension_numbers<[1], [0], [0], [1], [0, 0, 1, 1], [], []>} : vector<32x64xbf16>, vector<64x128xbf16>, vector<32x128xf32> -> vector<32x128xf32>
    %c0_7 = arith.constant 0 : index
    %c0_8 = arith.constant 0 : index
    %5 = vector.load %arg2[%c0_7, %c0_8] : memref<1x128xf32, #tpu.memory_space<vmem>>, vector<1x128xf32>
    %6 = vector.broadcast %5 : vector<1x128xf32> to vector<32x128xf32>
    %7 = arith.addf %4, %6 : vector<32x128xf32>
    %cst_9 = arith.constant 0.000000e+00 : f32
    %8 = vector.broadcast %cst_9 : f32 to vector<2x32xf32>
    %cst_10 = arith.constant 0.000000e+00 : bf16
    %9 = vector.broadcast %cst_10 : bf16 to vector<2x32xbf16>
    %10 = vector.extract_strided_slice %7 {offsets = [0, 0], sizes = [2, 128], strides = [1, 1]} : vector<32x128xf32> to vector<2x128xf32>
    %11 = arith.negf %10 : vector<2x128xf32>
    %12 = math.exp %11 : vector<2x128xf32>
    %cst_11 = arith.constant 1.000000e+00 : f32
    %13 = vector.broadcast %cst_11 : f32 to vector<2x128xf32>
    %14 = arith.addf %13, %12 : vector<2x128xf32>
    %15 = arith.divf %13, %14 : vector<2x128xf32>
    %16 = math.tanh %10 : vector<2x128xf32>
    %17 = vector.extract_strided_slice %15 {offsets = [0, 0], sizes = [2, 32], strides = [1, 1]} : vector<2x128xf32> to vector<2x32xf32>
    %18 = vector.extract_strided_slice %15 {offsets = [0, 32], sizes = [2, 32], strides = [1, 1]} : vector<2x128xf32> to vector<2x32xf32>
    %19 = vector.extract_strided_slice %16 {offsets = [0, 64], sizes = [2, 32], strides = [1, 1]} : vector<2x128xf32> to vector<2x32xf32>
    %20 = vector.extract_strided_slice %15 {offsets = [0, 96], sizes = [2, 32], strides = [1, 1]} : vector<2x128xf32> to vector<2x32xf32>
    %21 = arith.mulf %18, %8 : vector<2x32xf32>
    %22 = arith.mulf %17, %19 : vector<2x32xf32>
    %23 = arith.addf %21, %22 : vector<2x32xf32>
    %24 = math.tanh %23 : vector<2x32xf32>
    %25 = arith.mulf %20, %24 : vector<2x32xf32>
    %26 = arith.truncf %25 : vector<2x32xf32> to vector<2x32xbf16>
    %27 = tpu.concatenate %26, %9 in 1 : vector<2x32xbf16>, vector<2x32xbf16> -> vector<2x64xbf16>
    %cst_12 = arith.constant dense<0.000000e+00> : vector<2x256xf32>
    %28 = tpu.matmul %27, %0, %cst_12 {dimension_numbers = #tpu.dot_dimension_numbers<[1], [0], [0], [1], [0, 0, 1, 1], [], []>} : vector<2x64xbf16>, vector<64x256xbf16>, vector<2x256xf32> -> vector<2x256xf32>
    %29 = vector.extract_strided_slice %28 {offsets = [0, 0], sizes = [2, 128], strides = [1, 1]} : vector<2x256xf32> to vector<2x128xf32>
    %30 = vector.extract_strided_slice %28 {offsets = [0, 128], sizes = [2, 128], strides = [1, 1]} : vector<2x256xf32> to vector<2x128xf32>
    %31 = vector.extract_strided_slice %7 {offsets = [2, 0], sizes = [2, 128], strides = [1, 1]} : vector<32x128xf32> to vector<2x128xf32>
    %32 = arith.addf %31, %29 : vector<2x128xf32>
    %33 = arith.negf %32 : vector<2x128xf32>
    %34 = math.exp %33 : vector<2x128xf32>
    %cst_13 = arith.constant 1.000000e+00 : f32
    %35 = vector.broadcast %cst_13 : f32 to vector<2x128xf32>
    %36 = arith.addf %35, %34 : vector<2x128xf32>
    %37 = arith.divf %35, %36 : vector<2x128xf32>
    %38 = math.tanh %32 : vector<2x128xf32>
    %39 = vector.extract_strided_slice %37 {offsets = [0, 0], sizes = [2, 32], strides = [1, 1]} : vector<2x128xf32> to vector<2x32xf32>
    %40 = vector.extract_strided_slice %37 {offsets = [0, 32], sizes = [2, 32], strides = [1, 1]} : vector<2x128xf32> to vector<2x32xf32>
    %41 = vector.extract_strided_slice %38 {offsets = [0, 64], sizes = [2, 32], strides = [1, 1]} : vector<2x128xf32> to vector<2x32xf32>
    %42 = vector.extract_strided_slice %37 {offsets = [0, 96], sizes = [2, 32], strides = [1, 1]} : vector<2x128xf32> to vector<2x32xf32>
    %43 = arith.mulf %40, %23 : vector<2x32xf32>
    %44 = arith.mulf %39, %41 : vector<2x32xf32>
    %45 = arith.addf %43, %44 : vector<2x32xf32>
    %46 = math.tanh %45 : vector<2x32xf32>
    %47 = arith.mulf %42, %46 : vector<2x32xf32>
    %48 = vector.broadcast %1 : vector<1x128xf32> to vector<2x128xf32>
    %49 = arith.addf %30, %48 : vector<2x128xf32>
    %50 = arith.negf %49 : vector<2x128xf32>
    %51 = math.exp %50 : vector<2x128xf32>
    %cst_14 = arith.constant 1.000000e+00 : f32
    %52 = vector.broadcast %cst_14 : f32 to vector<2x128xf32>
    %53 = arith.addf %52, %51 : vector<2x128xf32>
    %54 = arith.divf %52, %53 : vector<2x128xf32>
    %55 = math.tanh %49 : vector<2x128xf32>
    %56 = vector.extract_strided_slice %54 {offsets = [0, 0], sizes = [2, 32], strides = [1, 1]} : vector<2x128xf32> to vector<2x32xf32>
    %57 = vector.extract_strided_slice %54 {offsets = [0, 32], sizes = [2, 32], strides = [1, 1]} : vector<2x128xf32> to vector<2x32xf32>
    %58 = vector.extract_strided_slice %55 {offsets = [0, 64], sizes = [2, 32], strides = [1, 1]} : vector<2x128xf32> to vector<2x32xf32>
    %59 = vector.extract_strided_slice %54 {offsets = [0, 96], sizes = [2, 32], strides = [1, 1]} : vector<2x128xf32> to vector<2x32xf32>
    %60 = arith.mulf %57, %8 : vector<2x32xf32>
    %61 = arith.mulf %56, %58 : vector<2x32xf32>
    %62 = arith.addf %60, %61 : vector<2x32xf32>
    %63 = math.tanh %62 : vector<2x32xf32>
    %64 = arith.mulf %59, %63 : vector<2x32xf32>
    %65 = arith.truncf %64 : vector<2x32xf32> to vector<2x32xbf16>
    %66 = arith.truncf %47 : vector<2x32xf32> to vector<2x32xbf16>
    %67 = tpu.concatenate %66, %65 in 1 : vector<2x32xbf16>, vector<2x32xbf16> -> vector<2x64xbf16>
    %cst_15 = arith.constant dense<0.000000e+00> : vector<2x256xf32>
    %68 = tpu.matmul %67, %0, %cst_15 {dimension_numbers = #tpu.dot_dimension_numbers<[1], [0], [0], [1], [0, 0, 1, 1], [], []>} : vector<2x64xbf16>, vector<64x256xbf16>, vector<2x256xf32> -> vector<2x256xf32>
    %69 = vector.extract_strided_slice %68 {offsets = [0, 0], sizes = [2, 128], strides = [1, 1]} : vector<2x256xf32> to vector<2x128xf32>
    %70 = vector.extract_strided_slice %68 {offsets = [0, 128], sizes = [2, 128], strides = [1, 1]} : vector<2x256xf32> to vector<2x128xf32>
    %71 = vector.extract_strided_slice %7 {offsets = [4, 0], sizes = [2, 128], strides = [1, 1]} : vector<32x128xf32> to vector<2x128xf32>
    %72 = arith.addf %71, %69 : vector<2x128xf32>
    %73 = arith.negf %72 : vector<2x128xf32>
    %74 = math.exp %73 : vector<2x128xf32>
    %cst_16 = arith.constant 1.000000e+00 : f32
    %75 = vector.broadcast %cst_16 : f32 to vector<2x128xf32>
    %76 = arith.addf %75, %74 : vector<2x128xf32>
    %77 = arith.divf %75, %76 : vector<2x128xf32>
    %78 = math.tanh %72 : vector<2x128xf32>
    %79 = vector.extract_strided_slice %77 {offsets = [0, 0], sizes = [2, 32], strides = [1, 1]} : vector<2x128xf32> to vector<2x32xf32>
    %80 = vector.extract_strided_slice %77 {offsets = [0, 32], sizes = [2, 32], strides = [1, 1]} : vector<2x128xf32> to vector<2x32xf32>
    %81 = vector.extract_strided_slice %78 {offsets = [0, 64], sizes = [2, 32], strides = [1, 1]} : vector<2x128xf32> to vector<2x32xf32>
    %82 = vector.extract_strided_slice %77 {offsets = [0, 96], sizes = [2, 32], strides = [1, 1]} : vector<2x128xf32> to vector<2x32xf32>
    %83 = arith.mulf %80, %45 : vector<2x32xf32>
    %84 = arith.mulf %79, %81 : vector<2x32xf32>
    %85 = arith.addf %83, %84 : vector<2x32xf32>
    %86 = math.tanh %85 : vector<2x32xf32>
    %87 = arith.mulf %82, %86 : vector<2x32xf32>
    %88 = vector.broadcast %1 : vector<1x128xf32> to vector<2x128xf32>
    %89 = arith.addf %70, %88 : vector<2x128xf32>
    %90 = arith.negf %89 : vector<2x128xf32>
    %91 = math.exp %90 : vector<2x128xf32>
    %cst_17 = arith.constant 1.000000e+00 : f32
    %92 = vector.broadcast %cst_17 : f32 to vector<2x128xf32>
    %93 = arith.addf %92, %91 : vector<2x128xf32>
    %94 = arith.divf %92, %93 : vector<2x128xf32>
    %95 = math.tanh %89 : vector<2x128xf32>
    %96 = vector.extract_strided_slice %94 {offsets = [0, 0], sizes = [2, 32], strides = [1, 1]} : vector<2x128xf32> to vector<2x32xf32>
    %97 = vector.extract_strided_slice %94 {offsets = [0, 32], sizes = [2, 32], strides = [1, 1]} : vector<2x128xf32> to vector<2x32xf32>
    %98 = vector.extract_strided_slice %95 {offsets = [0, 64], sizes = [2, 32], strides = [1, 1]} : vector<2x128xf32> to vector<2x32xf32>
    %99 = vector.extract_strided_slice %94 {offsets = [0, 96], sizes = [2, 32], strides = [1, 1]} : vector<2x128xf32> to vector<2x32xf32>
    %100 = arith.mulf %97, %62 : vector<2x32xf32>
    %101 = arith.mulf %96, %98 : vector<2x32xf32>
    %102 = arith.addf %100, %101 : vector<2x32xf32>
    %103 = math.tanh %102 : vector<2x32xf32>
    %104 = arith.mulf %99, %103 : vector<2x32xf32>
    %105 = arith.truncf %104 : vector<2x32xf32> to vector<2x32xbf16>
    %106 = arith.truncf %87 : vector<2x32xf32> to vector<2x32xbf16>
    %107 = tpu.concatenate %106, %105 in 1 : vector<2x32xbf16>, vector<2x32xbf16> -> vector<2x64xbf16>
    %cst_18 = arith.constant dense<0.000000e+00> : vector<2x256xf32>
    %108 = tpu.matmul %107, %0, %cst_18 {dimension_numbers = #tpu.dot_dimension_numbers<[1], [0], [0], [1], [0, 0, 1, 1], [], []>} : vector<2x64xbf16>, vector<64x256xbf16>, vector<2x256xf32> -> vector<2x256xf32>
    %109 = vector.extract_strided_slice %108 {offsets = [0, 0], sizes = [2, 128], strides = [1, 1]} : vector<2x256xf32> to vector<2x128xf32>
    %110 = vector.extract_strided_slice %108 {offsets = [0, 128], sizes = [2, 128], strides = [1, 1]} : vector<2x256xf32> to vector<2x128xf32>
    %111 = vector.extract_strided_slice %7 {offsets = [6, 0], sizes = [2, 128], strides = [1, 1]} : vector<32x128xf32> to vector<2x128xf32>
    %112 = arith.addf %111, %109 : vector<2x128xf32>
    %113 = arith.negf %112 : vector<2x128xf32>
    %114 = math.exp %113 : vector<2x128xf32>
    %cst_19 = arith.constant 1.000000e+00 : f32
    %115 = vector.broadcast %cst_19 : f32 to vector<2x128xf32>
    %116 = arith.addf %115, %114 : vector<2x128xf32>
    %117 = arith.divf %115, %116 : vector<2x128xf32>
    %118 = math.tanh %112 : vector<2x128xf32>
    %119 = vector.extract_strided_slice %117 {offsets = [0, 0], sizes = [2, 32], strides = [1, 1]} : vector<2x128xf32> to vector<2x32xf32>
    %120 = vector.extract_strided_slice %117 {offsets = [0, 32], sizes = [2, 32], strides = [1, 1]} : vector<2x128xf32> to vector<2x32xf32>
    %121 = vector.extract_strided_slice %118 {offsets = [0, 64], sizes = [2, 32], strides = [1, 1]} : vector<2x128xf32> to vector<2x32xf32>
    %122 = vector.extract_strided_slice %117 {offsets = [0, 96], sizes = [2, 32], strides = [1, 1]} : vector<2x128xf32> to vector<2x32xf32>
    %123 = arith.mulf %120, %85 : vector<2x32xf32>
    %124 = arith.mulf %119, %121 : vector<2x32xf32>
    %125 = arith.addf %123, %124 : vector<2x32xf32>
    %126 = math.tanh %125 : vector<2x32xf32>
    %127 = arith.mulf %122, %126 : vector<2x32xf32>
    %128 = vector.broadcast %1 : vector<1x128xf32> to vector<2x128xf32>
    %129 = arith.addf %110, %128 : vector<2x128xf32>
    %130 = arith.negf %129 : vector<2x128xf32>
    %131 = math.exp %130 : vector<2x128xf32>
    %cst_20 = arith.constant 1.000000e+00 : f32
    %132 = vector.broadcast %cst_20 : f32 to vector<2x128xf32>
    %133 = arith.addf %132, %131 : vector<2x128xf32>
    %134 = arith.divf %132, %133 : vector<2x128xf32>
    %135 = math.tanh %129 : vector<2x128xf32>
    %136 = vector.extract_strided_slice %134 {offsets = [0, 0], sizes = [2, 32], strides = [1, 1]} : vector<2x128xf32> to vector<2x32xf32>
    %137 = vector.extract_strided_slice %134 {offsets = [0, 32], sizes = [2, 32], strides = [1, 1]} : vector<2x128xf32> to vector<2x32xf32>
    %138 = vector.extract_strided_slice %135 {offsets = [0, 64], sizes = [2, 32], strides = [1, 1]} : vector<2x128xf32> to vector<2x32xf32>
    %139 = vector.extract_strided_slice %134 {offsets = [0, 96], sizes = [2, 32], strides = [1, 1]} : vector<2x128xf32> to vector<2x32xf32>
    %140 = arith.mulf %137, %102 : vector<2x32xf32>
    %141 = arith.mulf %136, %138 : vector<2x32xf32>
    %142 = arith.addf %140, %141 : vector<2x32xf32>
    %143 = math.tanh %142 : vector<2x32xf32>
    %144 = arith.mulf %139, %143 : vector<2x32xf32>
    %145 = arith.truncf %144 : vector<2x32xf32> to vector<2x32xbf16>
    %146 = arith.truncf %127 : vector<2x32xf32> to vector<2x32xbf16>
    %147 = tpu.concatenate %146, %145 in 1 : vector<2x32xbf16>, vector<2x32xbf16> -> vector<2x64xbf16>
    %cst_21 = arith.constant dense<0.000000e+00> : vector<2x256xf32>
    %148 = tpu.matmul %147, %0, %cst_21 {dimension_numbers = #tpu.dot_dimension_numbers<[1], [0], [0], [1], [0, 0, 1, 1], [], []>} : vector<2x64xbf16>, vector<64x256xbf16>, vector<2x256xf32> -> vector<2x256xf32>
    %149 = vector.extract_strided_slice %148 {offsets = [0, 0], sizes = [2, 128], strides = [1, 1]} : vector<2x256xf32> to vector<2x128xf32>
    %150 = vector.extract_strided_slice %148 {offsets = [0, 128], sizes = [2, 128], strides = [1, 1]} : vector<2x256xf32> to vector<2x128xf32>
    %151 = vector.extract_strided_slice %7 {offsets = [8, 0], sizes = [2, 128], strides = [1, 1]} : vector<32x128xf32> to vector<2x128xf32>
    %152 = arith.addf %151, %149 : vector<2x128xf32>
    %153 = arith.negf %152 : vector<2x128xf32>
    %154 = math.exp %153 : vector<2x128xf32>
    %cst_22 = arith.constant 1.000000e+00 : f32
    %155 = vector.broadcast %cst_22 : f32 to vector<2x128xf32>
    %156 = arith.addf %155, %154 : vector<2x128xf32>
    %157 = arith.divf %155, %156 : vector<2x128xf32>
    %158 = math.tanh %152 : vector<2x128xf32>
    %159 = vector.extract_strided_slice %157 {offsets = [0, 0], sizes = [2, 32], strides = [1, 1]} : vector<2x128xf32> to vector<2x32xf32>
    %160 = vector.extract_strided_slice %157 {offsets = [0, 32], sizes = [2, 32], strides = [1, 1]} : vector<2x128xf32> to vector<2x32xf32>
    %161 = vector.extract_strided_slice %158 {offsets = [0, 64], sizes = [2, 32], strides = [1, 1]} : vector<2x128xf32> to vector<2x32xf32>
    %162 = vector.extract_strided_slice %157 {offsets = [0, 96], sizes = [2, 32], strides = [1, 1]} : vector<2x128xf32> to vector<2x32xf32>
    %163 = arith.mulf %160, %125 : vector<2x32xf32>
    %164 = arith.mulf %159, %161 : vector<2x32xf32>
    %165 = arith.addf %163, %164 : vector<2x32xf32>
    %166 = math.tanh %165 : vector<2x32xf32>
    %167 = arith.mulf %162, %166 : vector<2x32xf32>
    %168 = vector.broadcast %1 : vector<1x128xf32> to vector<2x128xf32>
    %169 = arith.addf %150, %168 : vector<2x128xf32>
    %170 = arith.negf %169 : vector<2x128xf32>
    %171 = math.exp %170 : vector<2x128xf32>
    %cst_23 = arith.constant 1.000000e+00 : f32
    %172 = vector.broadcast %cst_23 : f32 to vector<2x128xf32>
    %173 = arith.addf %172, %171 : vector<2x128xf32>
    %174 = arith.divf %172, %173 : vector<2x128xf32>
    %175 = math.tanh %169 : vector<2x128xf32>
    %176 = vector.extract_strided_slice %174 {offsets = [0, 0], sizes = [2, 32], strides = [1, 1]} : vector<2x128xf32> to vector<2x32xf32>
    %177 = vector.extract_strided_slice %174 {offsets = [0, 32], sizes = [2, 32], strides = [1, 1]} : vector<2x128xf32> to vector<2x32xf32>
    %178 = vector.extract_strided_slice %175 {offsets = [0, 64], sizes = [2, 32], strides = [1, 1]} : vector<2x128xf32> to vector<2x32xf32>
    %179 = vector.extract_strided_slice %174 {offsets = [0, 96], sizes = [2, 32], strides = [1, 1]} : vector<2x128xf32> to vector<2x32xf32>
    %180 = arith.mulf %177, %142 : vector<2x32xf32>
    %181 = arith.mulf %176, %178 : vector<2x32xf32>
    %182 = arith.addf %180, %181 : vector<2x32xf32>
    %183 = math.tanh %182 : vector<2x32xf32>
    %184 = arith.mulf %179, %183 : vector<2x32xf32>
    %185 = arith.truncf %184 : vector<2x32xf32> to vector<2x32xbf16>
    %186 = arith.truncf %167 : vector<2x32xf32> to vector<2x32xbf16>
    %187 = tpu.concatenate %186, %185 in 1 : vector<2x32xbf16>, vector<2x32xbf16> -> vector<2x64xbf16>
    %cst_24 = arith.constant dense<0.000000e+00> : vector<2x256xf32>
    %188 = tpu.matmul %187, %0, %cst_24 {dimension_numbers = #tpu.dot_dimension_numbers<[1], [0], [0], [1], [0, 0, 1, 1], [], []>} : vector<2x64xbf16>, vector<64x256xbf16>, vector<2x256xf32> -> vector<2x256xf32>
    %189 = vector.extract_strided_slice %188 {offsets = [0, 0], sizes = [2, 128], strides = [1, 1]} : vector<2x256xf32> to vector<2x128xf32>
    %190 = vector.extract_strided_slice %188 {offsets = [0, 128], sizes = [2, 128], strides = [1, 1]} : vector<2x256xf32> to vector<2x128xf32>
    %191 = vector.extract_strided_slice %7 {offsets = [10, 0], sizes = [2, 128], strides = [1, 1]} : vector<32x128xf32> to vector<2x128xf32>
    %192 = arith.addf %191, %189 : vector<2x128xf32>
    %193 = arith.negf %192 : vector<2x128xf32>
    %194 = math.exp %193 : vector<2x128xf32>
    %cst_25 = arith.constant 1.000000e+00 : f32
    %195 = vector.broadcast %cst_25 : f32 to vector<2x128xf32>
    %196 = arith.addf %195, %194 : vector<2x128xf32>
    %197 = arith.divf %195, %196 : vector<2x128xf32>
    %198 = math.tanh %192 : vector<2x128xf32>
    %199 = vector.extract_strided_slice %197 {offsets = [0, 0], sizes = [2, 32], strides = [1, 1]} : vector<2x128xf32> to vector<2x32xf32>
    %200 = vector.extract_strided_slice %197 {offsets = [0, 32], sizes = [2, 32], strides = [1, 1]} : vector<2x128xf32> to vector<2x32xf32>
    %201 = vector.extract_strided_slice %198 {offsets = [0, 64], sizes = [2, 32], strides = [1, 1]} : vector<2x128xf32> to vector<2x32xf32>
    %202 = vector.extract_strided_slice %197 {offsets = [0, 96], sizes = [2, 32], strides = [1, 1]} : vector<2x128xf32> to vector<2x32xf32>
    %203 = arith.mulf %200, %165 : vector<2x32xf32>
    %204 = arith.mulf %199, %201 : vector<2x32xf32>
    %205 = arith.addf %203, %204 : vector<2x32xf32>
    %206 = math.tanh %205 : vector<2x32xf32>
    %207 = arith.mulf %202, %206 : vector<2x32xf32>
    %208 = vector.broadcast %1 : vector<1x128xf32> to vector<2x128xf32>
    %209 = arith.addf %190, %208 : vector<2x128xf32>
    %210 = arith.negf %209 : vector<2x128xf32>
    %211 = math.exp %210 : vector<2x128xf32>
    %cst_26 = arith.constant 1.000000e+00 : f32
    %212 = vector.broadcast %cst_26 : f32 to vector<2x128xf32>
    %213 = arith.addf %212, %211 : vector<2x128xf32>
    %214 = arith.divf %212, %213 : vector<2x128xf32>
    %215 = math.tanh %209 : vector<2x128xf32>
    %216 = vector.extract_strided_slice %214 {offsets = [0, 0], sizes = [2, 32], strides = [1, 1]} : vector<2x128xf32> to vector<2x32xf32>
    %217 = vector.extract_strided_slice %214 {offsets = [0, 32], sizes = [2, 32], strides = [1, 1]} : vector<2x128xf32> to vector<2x32xf32>
    %218 = vector.extract_strided_slice %215 {offsets = [0, 64], sizes = [2, 32], strides = [1, 1]} : vector<2x128xf32> to vector<2x32xf32>
    %219 = vector.extract_strided_slice %214 {offsets = [0, 96], sizes = [2, 32], strides = [1, 1]} : vector<2x128xf32> to vector<2x32xf32>
    %220 = arith.mulf %217, %182 : vector<2x32xf32>
    %221 = arith.mulf %216, %218 : vector<2x32xf32>
    %222 = arith.addf %220, %221 : vector<2x32xf32>
    %223 = math.tanh %222 : vector<2x32xf32>
    %224 = arith.mulf %219, %223 : vector<2x32xf32>
    %225 = arith.truncf %224 : vector<2x32xf32> to vector<2x32xbf16>
    %226 = arith.truncf %207 : vector<2x32xf32> to vector<2x32xbf16>
    %227 = tpu.concatenate %226, %225 in 1 : vector<2x32xbf16>, vector<2x32xbf16> -> vector<2x64xbf16>
    %cst_27 = arith.constant dense<0.000000e+00> : vector<2x256xf32>
    %228 = tpu.matmul %227, %0, %cst_27 {dimension_numbers = #tpu.dot_dimension_numbers<[1], [0], [0], [1], [0, 0, 1, 1], [], []>} : vector<2x64xbf16>, vector<64x256xbf16>, vector<2x256xf32> -> vector<2x256xf32>
    %229 = vector.extract_strided_slice %228 {offsets = [0, 0], sizes = [2, 128], strides = [1, 1]} : vector<2x256xf32> to vector<2x128xf32>
    %230 = vector.extract_strided_slice %228 {offsets = [0, 128], sizes = [2, 128], strides = [1, 1]} : vector<2x256xf32> to vector<2x128xf32>
    %231 = vector.extract_strided_slice %7 {offsets = [12, 0], sizes = [2, 128], strides = [1, 1]} : vector<32x128xf32> to vector<2x128xf32>
    %232 = arith.addf %231, %229 : vector<2x128xf32>
    %233 = arith.negf %232 : vector<2x128xf32>
    %234 = math.exp %233 : vector<2x128xf32>
    %cst_28 = arith.constant 1.000000e+00 : f32
    %235 = vector.broadcast %cst_28 : f32 to vector<2x128xf32>
    %236 = arith.addf %235, %234 : vector<2x128xf32>
    %237 = arith.divf %235, %236 : vector<2x128xf32>
    %238 = math.tanh %232 : vector<2x128xf32>
    %239 = vector.extract_strided_slice %237 {offsets = [0, 0], sizes = [2, 32], strides = [1, 1]} : vector<2x128xf32> to vector<2x32xf32>
    %240 = vector.extract_strided_slice %237 {offsets = [0, 32], sizes = [2, 32], strides = [1, 1]} : vector<2x128xf32> to vector<2x32xf32>
    %241 = vector.extract_strided_slice %238 {offsets = [0, 64], sizes = [2, 32], strides = [1, 1]} : vector<2x128xf32> to vector<2x32xf32>
    %242 = vector.extract_strided_slice %237 {offsets = [0, 96], sizes = [2, 32], strides = [1, 1]} : vector<2x128xf32> to vector<2x32xf32>
    %243 = arith.mulf %240, %205 : vector<2x32xf32>
    %244 = arith.mulf %239, %241 : vector<2x32xf32>
    %245 = arith.addf %243, %244 : vector<2x32xf32>
    %246 = math.tanh %245 : vector<2x32xf32>
    %247 = arith.mulf %242, %246 : vector<2x32xf32>
    %248 = vector.broadcast %1 : vector<1x128xf32> to vector<2x128xf32>
    %249 = arith.addf %230, %248 : vector<2x128xf32>
    %250 = arith.negf %249 : vector<2x128xf32>
    %251 = math.exp %250 : vector<2x128xf32>
    %cst_29 = arith.constant 1.000000e+00 : f32
    %252 = vector.broadcast %cst_29 : f32 to vector<2x128xf32>
    %253 = arith.addf %252, %251 : vector<2x128xf32>
    %254 = arith.divf %252, %253 : vector<2x128xf32>
    %255 = math.tanh %249 : vector<2x128xf32>
    %256 = vector.extract_strided_slice %254 {offsets = [0, 0], sizes = [2, 32], strides = [1, 1]} : vector<2x128xf32> to vector<2x32xf32>
    %257 = vector.extract_strided_slice %254 {offsets = [0, 32], sizes = [2, 32], strides = [1, 1]} : vector<2x128xf32> to vector<2x32xf32>
    %258 = vector.extract_strided_slice %255 {offsets = [0, 64], sizes = [2, 32], strides = [1, 1]} : vector<2x128xf32> to vector<2x32xf32>
    %259 = vector.extract_strided_slice %254 {offsets = [0, 96], sizes = [2, 32], strides = [1, 1]} : vector<2x128xf32> to vector<2x32xf32>
    %260 = arith.mulf %257, %222 : vector<2x32xf32>
    %261 = arith.mulf %256, %258 : vector<2x32xf32>
    %262 = arith.addf %260, %261 : vector<2x32xf32>
    %263 = math.tanh %262 : vector<2x32xf32>
    %264 = arith.mulf %259, %263 : vector<2x32xf32>
    %265 = arith.truncf %264 : vector<2x32xf32> to vector<2x32xbf16>
    %266 = arith.truncf %247 : vector<2x32xf32> to vector<2x32xbf16>
    %267 = tpu.concatenate %266, %265 in 1 : vector<2x32xbf16>, vector<2x32xbf16> -> vector<2x64xbf16>
    %cst_30 = arith.constant dense<0.000000e+00> : vector<2x256xf32>
    %268 = tpu.matmul %267, %0, %cst_30 {dimension_numbers = #tpu.dot_dimension_numbers<[1], [0], [0], [1], [0, 0, 1, 1], [], []>} : vector<2x64xbf16>, vector<64x256xbf16>, vector<2x256xf32> -> vector<2x256xf32>
    %269 = vector.extract_strided_slice %268 {offsets = [0, 0], sizes = [2, 128], strides = [1, 1]} : vector<2x256xf32> to vector<2x128xf32>
    %270 = vector.extract_strided_slice %268 {offsets = [0, 128], sizes = [2, 128], strides = [1, 1]} : vector<2x256xf32> to vector<2x128xf32>
    %271 = vector.extract_strided_slice %7 {offsets = [14, 0], sizes = [2, 128], strides = [1, 1]} : vector<32x128xf32> to vector<2x128xf32>
    %272 = arith.addf %271, %269 : vector<2x128xf32>
    %273 = arith.negf %272 : vector<2x128xf32>
    %274 = math.exp %273 : vector<2x128xf32>
    %cst_31 = arith.constant 1.000000e+00 : f32
    %275 = vector.broadcast %cst_31 : f32 to vector<2x128xf32>
    %276 = arith.addf %275, %274 : vector<2x128xf32>
    %277 = arith.divf %275, %276 : vector<2x128xf32>
    %278 = math.tanh %272 : vector<2x128xf32>
    %279 = vector.extract_strided_slice %277 {offsets = [0, 0], sizes = [2, 32], strides = [1, 1]} : vector<2x128xf32> to vector<2x32xf32>
    %280 = vector.extract_strided_slice %277 {offsets = [0, 32], sizes = [2, 32], strides = [1, 1]} : vector<2x128xf32> to vector<2x32xf32>
    %281 = vector.extract_strided_slice %278 {offsets = [0, 64], sizes = [2, 32], strides = [1, 1]} : vector<2x128xf32> to vector<2x32xf32>
    %282 = vector.extract_strided_slice %277 {offsets = [0, 96], sizes = [2, 32], strides = [1, 1]} : vector<2x128xf32> to vector<2x32xf32>
    %283 = arith.mulf %280, %245 : vector<2x32xf32>
    %284 = arith.mulf %279, %281 : vector<2x32xf32>
    %285 = arith.addf %283, %284 : vector<2x32xf32>
    %286 = math.tanh %285 : vector<2x32xf32>
    %287 = arith.mulf %282, %286 : vector<2x32xf32>
    %288 = vector.broadcast %1 : vector<1x128xf32> to vector<2x128xf32>
    %289 = arith.addf %270, %288 : vector<2x128xf32>
    %290 = arith.negf %289 : vector<2x128xf32>
    %291 = math.exp %290 : vector<2x128xf32>
    %cst_32 = arith.constant 1.000000e+00 : f32
    %292 = vector.broadcast %cst_32 : f32 to vector<2x128xf32>
    %293 = arith.addf %292, %291 : vector<2x128xf32>
    %294 = arith.divf %292, %293 : vector<2x128xf32>
    %295 = math.tanh %289 : vector<2x128xf32>
    %296 = vector.extract_strided_slice %294 {offsets = [0, 0], sizes = [2, 32], strides = [1, 1]} : vector<2x128xf32> to vector<2x32xf32>
    %297 = vector.extract_strided_slice %294 {offsets = [0, 32], sizes = [2, 32], strides = [1, 1]} : vector<2x128xf32> to vector<2x32xf32>
    %298 = vector.extract_strided_slice %295 {offsets = [0, 64], sizes = [2, 32], strides = [1, 1]} : vector<2x128xf32> to vector<2x32xf32>
    %299 = vector.extract_strided_slice %294 {offsets = [0, 96], sizes = [2, 32], strides = [1, 1]} : vector<2x128xf32> to vector<2x32xf32>
    %300 = arith.mulf %297, %262 : vector<2x32xf32>
    %301 = arith.mulf %296, %298 : vector<2x32xf32>
    %302 = arith.addf %300, %301 : vector<2x32xf32>
    %303 = math.tanh %302 : vector<2x32xf32>
    %304 = arith.mulf %299, %303 : vector<2x32xf32>
    %305 = arith.truncf %304 : vector<2x32xf32> to vector<2x32xbf16>
    %306 = arith.truncf %287 : vector<2x32xf32> to vector<2x32xbf16>
    %307 = tpu.concatenate %306, %305 in 1 : vector<2x32xbf16>, vector<2x32xbf16> -> vector<2x64xbf16>
    %cst_33 = arith.constant dense<0.000000e+00> : vector<2x256xf32>
    %308 = tpu.matmul %307, %0, %cst_33 {dimension_numbers = #tpu.dot_dimension_numbers<[1], [0], [0], [1], [0, 0, 1, 1], [], []>} : vector<2x64xbf16>, vector<64x256xbf16>, vector<2x256xf32> -> vector<2x256xf32>
    %309 = vector.extract_strided_slice %308 {offsets = [0, 0], sizes = [2, 128], strides = [1, 1]} : vector<2x256xf32> to vector<2x128xf32>
    %310 = vector.extract_strided_slice %308 {offsets = [0, 128], sizes = [2, 128], strides = [1, 1]} : vector<2x256xf32> to vector<2x128xf32>
    %311 = vector.extract_strided_slice %7 {offsets = [16, 0], sizes = [2, 128], strides = [1, 1]} : vector<32x128xf32> to vector<2x128xf32>
    %312 = arith.addf %311, %309 : vector<2x128xf32>
    %313 = arith.negf %312 : vector<2x128xf32>
    %314 = math.exp %313 : vector<2x128xf32>
    %cst_34 = arith.constant 1.000000e+00 : f32
    %315 = vector.broadcast %cst_34 : f32 to vector<2x128xf32>
    %316 = arith.addf %315, %314 : vector<2x128xf32>
    %317 = arith.divf %315, %316 : vector<2x128xf32>
    %318 = math.tanh %312 : vector<2x128xf32>
    %319 = vector.extract_strided_slice %317 {offsets = [0, 0], sizes = [2, 32], strides = [1, 1]} : vector<2x128xf32> to vector<2x32xf32>
    %320 = vector.extract_strided_slice %317 {offsets = [0, 32], sizes = [2, 32], strides = [1, 1]} : vector<2x128xf32> to vector<2x32xf32>
    %321 = vector.extract_strided_slice %318 {offsets = [0, 64], sizes = [2, 32], strides = [1, 1]} : vector<2x128xf32> to vector<2x32xf32>
    %322 = vector.extract_strided_slice %317 {offsets = [0, 96], sizes = [2, 32], strides = [1, 1]} : vector<2x128xf32> to vector<2x32xf32>
    %323 = arith.mulf %320, %285 : vector<2x32xf32>
    %324 = arith.mulf %319, %321 : vector<2x32xf32>
    %325 = arith.addf %323, %324 : vector<2x32xf32>
    %326 = math.tanh %325 : vector<2x32xf32>
    %327 = arith.mulf %322, %326 : vector<2x32xf32>
    %328 = vector.broadcast %1 : vector<1x128xf32> to vector<2x128xf32>
    %329 = arith.addf %310, %328 : vector<2x128xf32>
    %330 = arith.negf %329 : vector<2x128xf32>
    %331 = math.exp %330 : vector<2x128xf32>
    %cst_35 = arith.constant 1.000000e+00 : f32
    %332 = vector.broadcast %cst_35 : f32 to vector<2x128xf32>
    %333 = arith.addf %332, %331 : vector<2x128xf32>
    %334 = arith.divf %332, %333 : vector<2x128xf32>
    %335 = math.tanh %329 : vector<2x128xf32>
    %336 = vector.extract_strided_slice %334 {offsets = [0, 0], sizes = [2, 32], strides = [1, 1]} : vector<2x128xf32> to vector<2x32xf32>
    %337 = vector.extract_strided_slice %334 {offsets = [0, 32], sizes = [2, 32], strides = [1, 1]} : vector<2x128xf32> to vector<2x32xf32>
    %338 = vector.extract_strided_slice %335 {offsets = [0, 64], sizes = [2, 32], strides = [1, 1]} : vector<2x128xf32> to vector<2x32xf32>
    %339 = vector.extract_strided_slice %334 {offsets = [0, 96], sizes = [2, 32], strides = [1, 1]} : vector<2x128xf32> to vector<2x32xf32>
    %340 = arith.mulf %337, %302 : vector<2x32xf32>
    %341 = arith.mulf %336, %338 : vector<2x32xf32>
    %342 = arith.addf %340, %341 : vector<2x32xf32>
    %343 = math.tanh %342 : vector<2x32xf32>
    %344 = arith.mulf %339, %343 : vector<2x32xf32>
    %345 = arith.truncf %344 : vector<2x32xf32> to vector<2x32xbf16>
    %346 = arith.truncf %327 : vector<2x32xf32> to vector<2x32xbf16>
    %347 = tpu.concatenate %346, %345 in 1 : vector<2x32xbf16>, vector<2x32xbf16> -> vector<2x64xbf16>
    %cst_36 = arith.constant dense<0.000000e+00> : vector<2x256xf32>
    %348 = tpu.matmul %347, %0, %cst_36 {dimension_numbers = #tpu.dot_dimension_numbers<[1], [0], [0], [1], [0, 0, 1, 1], [], []>} : vector<2x64xbf16>, vector<64x256xbf16>, vector<2x256xf32> -> vector<2x256xf32>
    %349 = vector.extract_strided_slice %348 {offsets = [0, 0], sizes = [2, 128], strides = [1, 1]} : vector<2x256xf32> to vector<2x128xf32>
    %350 = vector.extract_strided_slice %348 {offsets = [0, 128], sizes = [2, 128], strides = [1, 1]} : vector<2x256xf32> to vector<2x128xf32>
    %351 = vector.extract_strided_slice %7 {offsets = [18, 0], sizes = [2, 128], strides = [1, 1]} : vector<32x128xf32> to vector<2x128xf32>
    %352 = arith.addf %351, %349 : vector<2x128xf32>
    %353 = arith.negf %352 : vector<2x128xf32>
    %354 = math.exp %353 : vector<2x128xf32>
    %cst_37 = arith.constant 1.000000e+00 : f32
    %355 = vector.broadcast %cst_37 : f32 to vector<2x128xf32>
    %356 = arith.addf %355, %354 : vector<2x128xf32>
    %357 = arith.divf %355, %356 : vector<2x128xf32>
    %358 = math.tanh %352 : vector<2x128xf32>
    %359 = vector.extract_strided_slice %357 {offsets = [0, 0], sizes = [2, 32], strides = [1, 1]} : vector<2x128xf32> to vector<2x32xf32>
    %360 = vector.extract_strided_slice %357 {offsets = [0, 32], sizes = [2, 32], strides = [1, 1]} : vector<2x128xf32> to vector<2x32xf32>
    %361 = vector.extract_strided_slice %358 {offsets = [0, 64], sizes = [2, 32], strides = [1, 1]} : vector<2x128xf32> to vector<2x32xf32>
    %362 = vector.extract_strided_slice %357 {offsets = [0, 96], sizes = [2, 32], strides = [1, 1]} : vector<2x128xf32> to vector<2x32xf32>
    %363 = arith.mulf %360, %325 : vector<2x32xf32>
    %364 = arith.mulf %359, %361 : vector<2x32xf32>
    %365 = arith.addf %363, %364 : vector<2x32xf32>
    %366 = math.tanh %365 : vector<2x32xf32>
    %367 = arith.mulf %362, %366 : vector<2x32xf32>
    %368 = vector.broadcast %1 : vector<1x128xf32> to vector<2x128xf32>
    %369 = arith.addf %350, %368 : vector<2x128xf32>
    %370 = arith.negf %369 : vector<2x128xf32>
    %371 = math.exp %370 : vector<2x128xf32>
    %cst_38 = arith.constant 1.000000e+00 : f32
    %372 = vector.broadcast %cst_38 : f32 to vector<2x128xf32>
    %373 = arith.addf %372, %371 : vector<2x128xf32>
    %374 = arith.divf %372, %373 : vector<2x128xf32>
    %375 = math.tanh %369 : vector<2x128xf32>
    %376 = vector.extract_strided_slice %374 {offsets = [0, 0], sizes = [2, 32], strides = [1, 1]} : vector<2x128xf32> to vector<2x32xf32>
    %377 = vector.extract_strided_slice %374 {offsets = [0, 32], sizes = [2, 32], strides = [1, 1]} : vector<2x128xf32> to vector<2x32xf32>
    %378 = vector.extract_strided_slice %375 {offsets = [0, 64], sizes = [2, 32], strides = [1, 1]} : vector<2x128xf32> to vector<2x32xf32>
    %379 = vector.extract_strided_slice %374 {offsets = [0, 96], sizes = [2, 32], strides = [1, 1]} : vector<2x128xf32> to vector<2x32xf32>
    %380 = arith.mulf %377, %342 : vector<2x32xf32>
    %381 = arith.mulf %376, %378 : vector<2x32xf32>
    %382 = arith.addf %380, %381 : vector<2x32xf32>
    %383 = math.tanh %382 : vector<2x32xf32>
    %384 = arith.mulf %379, %383 : vector<2x32xf32>
    %385 = arith.truncf %384 : vector<2x32xf32> to vector<2x32xbf16>
    %386 = arith.truncf %367 : vector<2x32xf32> to vector<2x32xbf16>
    %387 = tpu.concatenate %386, %385 in 1 : vector<2x32xbf16>, vector<2x32xbf16> -> vector<2x64xbf16>
    %cst_39 = arith.constant dense<0.000000e+00> : vector<2x256xf32>
    %388 = tpu.matmul %387, %0, %cst_39 {dimension_numbers = #tpu.dot_dimension_numbers<[1], [0], [0], [1], [0, 0, 1, 1], [], []>} : vector<2x64xbf16>, vector<64x256xbf16>, vector<2x256xf32> -> vector<2x256xf32>
    %389 = vector.extract_strided_slice %388 {offsets = [0, 0], sizes = [2, 128], strides = [1, 1]} : vector<2x256xf32> to vector<2x128xf32>
    %390 = vector.extract_strided_slice %388 {offsets = [0, 128], sizes = [2, 128], strides = [1, 1]} : vector<2x256xf32> to vector<2x128xf32>
    %391 = vector.extract_strided_slice %7 {offsets = [20, 0], sizes = [2, 128], strides = [1, 1]} : vector<32x128xf32> to vector<2x128xf32>
    %392 = arith.addf %391, %389 : vector<2x128xf32>
    %393 = arith.negf %392 : vector<2x128xf32>
    %394 = math.exp %393 : vector<2x128xf32>
    %cst_40 = arith.constant 1.000000e+00 : f32
    %395 = vector.broadcast %cst_40 : f32 to vector<2x128xf32>
    %396 = arith.addf %395, %394 : vector<2x128xf32>
    %397 = arith.divf %395, %396 : vector<2x128xf32>
    %398 = math.tanh %392 : vector<2x128xf32>
    %399 = vector.extract_strided_slice %397 {offsets = [0, 0], sizes = [2, 32], strides = [1, 1]} : vector<2x128xf32> to vector<2x32xf32>
    %400 = vector.extract_strided_slice %397 {offsets = [0, 32], sizes = [2, 32], strides = [1, 1]} : vector<2x128xf32> to vector<2x32xf32>
    %401 = vector.extract_strided_slice %398 {offsets = [0, 64], sizes = [2, 32], strides = [1, 1]} : vector<2x128xf32> to vector<2x32xf32>
    %402 = vector.extract_strided_slice %397 {offsets = [0, 96], sizes = [2, 32], strides = [1, 1]} : vector<2x128xf32> to vector<2x32xf32>
    %403 = arith.mulf %400, %365 : vector<2x32xf32>
    %404 = arith.mulf %399, %401 : vector<2x32xf32>
    %405 = arith.addf %403, %404 : vector<2x32xf32>
    %406 = math.tanh %405 : vector<2x32xf32>
    %407 = arith.mulf %402, %406 : vector<2x32xf32>
    %408 = vector.broadcast %1 : vector<1x128xf32> to vector<2x128xf32>
    %409 = arith.addf %390, %408 : vector<2x128xf32>
    %410 = arith.negf %409 : vector<2x128xf32>
    %411 = math.exp %410 : vector<2x128xf32>
    %cst_41 = arith.constant 1.000000e+00 : f32
    %412 = vector.broadcast %cst_41 : f32 to vector<2x128xf32>
    %413 = arith.addf %412, %411 : vector<2x128xf32>
    %414 = arith.divf %412, %413 : vector<2x128xf32>
    %415 = math.tanh %409 : vector<2x128xf32>
    %416 = vector.extract_strided_slice %414 {offsets = [0, 0], sizes = [2, 32], strides = [1, 1]} : vector<2x128xf32> to vector<2x32xf32>
    %417 = vector.extract_strided_slice %414 {offsets = [0, 32], sizes = [2, 32], strides = [1, 1]} : vector<2x128xf32> to vector<2x32xf32>
    %418 = vector.extract_strided_slice %415 {offsets = [0, 64], sizes = [2, 32], strides = [1, 1]} : vector<2x128xf32> to vector<2x32xf32>
    %419 = vector.extract_strided_slice %414 {offsets = [0, 96], sizes = [2, 32], strides = [1, 1]} : vector<2x128xf32> to vector<2x32xf32>
    %420 = arith.mulf %417, %382 : vector<2x32xf32>
    %421 = arith.mulf %416, %418 : vector<2x32xf32>
    %422 = arith.addf %420, %421 : vector<2x32xf32>
    %423 = math.tanh %422 : vector<2x32xf32>
    %424 = arith.mulf %419, %423 : vector<2x32xf32>
    %425 = arith.truncf %424 : vector<2x32xf32> to vector<2x32xbf16>
    %426 = arith.truncf %407 : vector<2x32xf32> to vector<2x32xbf16>
    %427 = tpu.concatenate %426, %425 in 1 : vector<2x32xbf16>, vector<2x32xbf16> -> vector<2x64xbf16>
    %cst_42 = arith.constant dense<0.000000e+00> : vector<2x256xf32>
    %428 = tpu.matmul %427, %0, %cst_42 {dimension_numbers = #tpu.dot_dimension_numbers<[1], [0], [0], [1], [0, 0, 1, 1], [], []>} : vector<2x64xbf16>, vector<64x256xbf16>, vector<2x256xf32> -> vector<2x256xf32>
    %429 = vector.extract_strided_slice %428 {offsets = [0, 0], sizes = [2, 128], strides = [1, 1]} : vector<2x256xf32> to vector<2x128xf32>
    %430 = vector.extract_strided_slice %428 {offsets = [0, 128], sizes = [2, 128], strides = [1, 1]} : vector<2x256xf32> to vector<2x128xf32>
    %431 = vector.extract_strided_slice %7 {offsets = [22, 0], sizes = [2, 128], strides = [1, 1]} : vector<32x128xf32> to vector<2x128xf32>
    %432 = arith.addf %431, %429 : vector<2x128xf32>
    %433 = arith.negf %432 : vector<2x128xf32>
    %434 = math.exp %433 : vector<2x128xf32>
    %cst_43 = arith.constant 1.000000e+00 : f32
    %435 = vector.broadcast %cst_43 : f32 to vector<2x128xf32>
    %436 = arith.addf %435, %434 : vector<2x128xf32>
    %437 = arith.divf %435, %436 : vector<2x128xf32>
    %438 = math.tanh %432 : vector<2x128xf32>
    %439 = vector.extract_strided_slice %437 {offsets = [0, 0], sizes = [2, 32], strides = [1, 1]} : vector<2x128xf32> to vector<2x32xf32>
    %440 = vector.extract_strided_slice %437 {offsets = [0, 32], sizes = [2, 32], strides = [1, 1]} : vector<2x128xf32> to vector<2x32xf32>
    %441 = vector.extract_strided_slice %438 {offsets = [0, 64], sizes = [2, 32], strides = [1, 1]} : vector<2x128xf32> to vector<2x32xf32>
    %442 = vector.extract_strided_slice %437 {offsets = [0, 96], sizes = [2, 32], strides = [1, 1]} : vector<2x128xf32> to vector<2x32xf32>
    %443 = arith.mulf %440, %405 : vector<2x32xf32>
    %444 = arith.mulf %439, %441 : vector<2x32xf32>
    %445 = arith.addf %443, %444 : vector<2x32xf32>
    %446 = math.tanh %445 : vector<2x32xf32>
    %447 = arith.mulf %442, %446 : vector<2x32xf32>
    %448 = vector.broadcast %1 : vector<1x128xf32> to vector<2x128xf32>
    %449 = arith.addf %430, %448 : vector<2x128xf32>
    %450 = arith.negf %449 : vector<2x128xf32>
    %451 = math.exp %450 : vector<2x128xf32>
    %cst_44 = arith.constant 1.000000e+00 : f32
    %452 = vector.broadcast %cst_44 : f32 to vector<2x128xf32>
    %453 = arith.addf %452, %451 : vector<2x128xf32>
    %454 = arith.divf %452, %453 : vector<2x128xf32>
    %455 = math.tanh %449 : vector<2x128xf32>
    %456 = vector.extract_strided_slice %454 {offsets = [0, 0], sizes = [2, 32], strides = [1, 1]} : vector<2x128xf32> to vector<2x32xf32>
    %457 = vector.extract_strided_slice %454 {offsets = [0, 32], sizes = [2, 32], strides = [1, 1]} : vector<2x128xf32> to vector<2x32xf32>
    %458 = vector.extract_strided_slice %455 {offsets = [0, 64], sizes = [2, 32], strides = [1, 1]} : vector<2x128xf32> to vector<2x32xf32>
    %459 = vector.extract_strided_slice %454 {offsets = [0, 96], sizes = [2, 32], strides = [1, 1]} : vector<2x128xf32> to vector<2x32xf32>
    %460 = arith.mulf %457, %422 : vector<2x32xf32>
    %461 = arith.mulf %456, %458 : vector<2x32xf32>
    %462 = arith.addf %460, %461 : vector<2x32xf32>
    %463 = math.tanh %462 : vector<2x32xf32>
    %464 = arith.mulf %459, %463 : vector<2x32xf32>
    %465 = arith.truncf %464 : vector<2x32xf32> to vector<2x32xbf16>
    %466 = arith.truncf %447 : vector<2x32xf32> to vector<2x32xbf16>
    %467 = tpu.concatenate %466, %465 in 1 : vector<2x32xbf16>, vector<2x32xbf16> -> vector<2x64xbf16>
    %cst_45 = arith.constant dense<0.000000e+00> : vector<2x256xf32>
    %468 = tpu.matmul %467, %0, %cst_45 {dimension_numbers = #tpu.dot_dimension_numbers<[1], [0], [0], [1], [0, 0, 1, 1], [], []>} : vector<2x64xbf16>, vector<64x256xbf16>, vector<2x256xf32> -> vector<2x256xf32>
    %469 = vector.extract_strided_slice %468 {offsets = [0, 0], sizes = [2, 128], strides = [1, 1]} : vector<2x256xf32> to vector<2x128xf32>
    %470 = vector.extract_strided_slice %468 {offsets = [0, 128], sizes = [2, 128], strides = [1, 1]} : vector<2x256xf32> to vector<2x128xf32>
    %471 = vector.extract_strided_slice %7 {offsets = [24, 0], sizes = [2, 128], strides = [1, 1]} : vector<32x128xf32> to vector<2x128xf32>
    %472 = arith.addf %471, %469 : vector<2x128xf32>
    %473 = arith.negf %472 : vector<2x128xf32>
    %474 = math.exp %473 : vector<2x128xf32>
    %cst_46 = arith.constant 1.000000e+00 : f32
    %475 = vector.broadcast %cst_46 : f32 to vector<2x128xf32>
    %476 = arith.addf %475, %474 : vector<2x128xf32>
    %477 = arith.divf %475, %476 : vector<2x128xf32>
    %478 = math.tanh %472 : vector<2x128xf32>
    %479 = vector.extract_strided_slice %477 {offsets = [0, 0], sizes = [2, 32], strides = [1, 1]} : vector<2x128xf32> to vector<2x32xf32>
    %480 = vector.extract_strided_slice %477 {offsets = [0, 32], sizes = [2, 32], strides = [1, 1]} : vector<2x128xf32> to vector<2x32xf32>
    %481 = vector.extract_strided_slice %478 {offsets = [0, 64], sizes = [2, 32], strides = [1, 1]} : vector<2x128xf32> to vector<2x32xf32>
    %482 = vector.extract_strided_slice %477 {offsets = [0, 96], sizes = [2, 32], strides = [1, 1]} : vector<2x128xf32> to vector<2x32xf32>
    %483 = arith.mulf %480, %445 : vector<2x32xf32>
    %484 = arith.mulf %479, %481 : vector<2x32xf32>
    %485 = arith.addf %483, %484 : vector<2x32xf32>
    %486 = math.tanh %485 : vector<2x32xf32>
    %487 = arith.mulf %482, %486 : vector<2x32xf32>
    %488 = vector.broadcast %1 : vector<1x128xf32> to vector<2x128xf32>
    %489 = arith.addf %470, %488 : vector<2x128xf32>
    %490 = arith.negf %489 : vector<2x128xf32>
    %491 = math.exp %490 : vector<2x128xf32>
    %cst_47 = arith.constant 1.000000e+00 : f32
    %492 = vector.broadcast %cst_47 : f32 to vector<2x128xf32>
    %493 = arith.addf %492, %491 : vector<2x128xf32>
    %494 = arith.divf %492, %493 : vector<2x128xf32>
    %495 = math.tanh %489 : vector<2x128xf32>
    %496 = vector.extract_strided_slice %494 {offsets = [0, 0], sizes = [2, 32], strides = [1, 1]} : vector<2x128xf32> to vector<2x32xf32>
    %497 = vector.extract_strided_slice %494 {offsets = [0, 32], sizes = [2, 32], strides = [1, 1]} : vector<2x128xf32> to vector<2x32xf32>
    %498 = vector.extract_strided_slice %495 {offsets = [0, 64], sizes = [2, 32], strides = [1, 1]} : vector<2x128xf32> to vector<2x32xf32>
    %499 = vector.extract_strided_slice %494 {offsets = [0, 96], sizes = [2, 32], strides = [1, 1]} : vector<2x128xf32> to vector<2x32xf32>
    %500 = arith.mulf %497, %462 : vector<2x32xf32>
    %501 = arith.mulf %496, %498 : vector<2x32xf32>
    %502 = arith.addf %500, %501 : vector<2x32xf32>
    %503 = math.tanh %502 : vector<2x32xf32>
    %504 = arith.mulf %499, %503 : vector<2x32xf32>
    %505 = arith.truncf %504 : vector<2x32xf32> to vector<2x32xbf16>
    %506 = arith.truncf %487 : vector<2x32xf32> to vector<2x32xbf16>
    %507 = tpu.concatenate %506, %505 in 1 : vector<2x32xbf16>, vector<2x32xbf16> -> vector<2x64xbf16>
    %cst_48 = arith.constant dense<0.000000e+00> : vector<2x256xf32>
    %508 = tpu.matmul %507, %0, %cst_48 {dimension_numbers = #tpu.dot_dimension_numbers<[1], [0], [0], [1], [0, 0, 1, 1], [], []>} : vector<2x64xbf16>, vector<64x256xbf16>, vector<2x256xf32> -> vector<2x256xf32>
    %509 = vector.extract_strided_slice %508 {offsets = [0, 0], sizes = [2, 128], strides = [1, 1]} : vector<2x256xf32> to vector<2x128xf32>
    %510 = vector.extract_strided_slice %508 {offsets = [0, 128], sizes = [2, 128], strides = [1, 1]} : vector<2x256xf32> to vector<2x128xf32>
    %511 = vector.extract_strided_slice %7 {offsets = [26, 0], sizes = [2, 128], strides = [1, 1]} : vector<32x128xf32> to vector<2x128xf32>
    %512 = arith.addf %511, %509 : vector<2x128xf32>
    %513 = arith.negf %512 : vector<2x128xf32>
    %514 = math.exp %513 : vector<2x128xf32>
    %cst_49 = arith.constant 1.000000e+00 : f32
    %515 = vector.broadcast %cst_49 : f32 to vector<2x128xf32>
    %516 = arith.addf %515, %514 : vector<2x128xf32>
    %517 = arith.divf %515, %516 : vector<2x128xf32>
    %518 = math.tanh %512 : vector<2x128xf32>
    %519 = vector.extract_strided_slice %517 {offsets = [0, 0], sizes = [2, 32], strides = [1, 1]} : vector<2x128xf32> to vector<2x32xf32>
    %520 = vector.extract_strided_slice %517 {offsets = [0, 32], sizes = [2, 32], strides = [1, 1]} : vector<2x128xf32> to vector<2x32xf32>
    %521 = vector.extract_strided_slice %518 {offsets = [0, 64], sizes = [2, 32], strides = [1, 1]} : vector<2x128xf32> to vector<2x32xf32>
    %522 = vector.extract_strided_slice %517 {offsets = [0, 96], sizes = [2, 32], strides = [1, 1]} : vector<2x128xf32> to vector<2x32xf32>
    %523 = arith.mulf %520, %485 : vector<2x32xf32>
    %524 = arith.mulf %519, %521 : vector<2x32xf32>
    %525 = arith.addf %523, %524 : vector<2x32xf32>
    %526 = math.tanh %525 : vector<2x32xf32>
    %527 = arith.mulf %522, %526 : vector<2x32xf32>
    %528 = vector.broadcast %1 : vector<1x128xf32> to vector<2x128xf32>
    %529 = arith.addf %510, %528 : vector<2x128xf32>
    %530 = arith.negf %529 : vector<2x128xf32>
    %531 = math.exp %530 : vector<2x128xf32>
    %cst_50 = arith.constant 1.000000e+00 : f32
    %532 = vector.broadcast %cst_50 : f32 to vector<2x128xf32>
    %533 = arith.addf %532, %531 : vector<2x128xf32>
    %534 = arith.divf %532, %533 : vector<2x128xf32>
    %535 = math.tanh %529 : vector<2x128xf32>
    %536 = vector.extract_strided_slice %534 {offsets = [0, 0], sizes = [2, 32], strides = [1, 1]} : vector<2x128xf32> to vector<2x32xf32>
    %537 = vector.extract_strided_slice %534 {offsets = [0, 32], sizes = [2, 32], strides = [1, 1]} : vector<2x128xf32> to vector<2x32xf32>
    %538 = vector.extract_strided_slice %535 {offsets = [0, 64], sizes = [2, 32], strides = [1, 1]} : vector<2x128xf32> to vector<2x32xf32>
    %539 = vector.extract_strided_slice %534 {offsets = [0, 96], sizes = [2, 32], strides = [1, 1]} : vector<2x128xf32> to vector<2x32xf32>
    %540 = arith.mulf %537, %502 : vector<2x32xf32>
    %541 = arith.mulf %536, %538 : vector<2x32xf32>
    %542 = arith.addf %540, %541 : vector<2x32xf32>
    %543 = math.tanh %542 : vector<2x32xf32>
    %544 = arith.mulf %539, %543 : vector<2x32xf32>
    %545 = arith.truncf %544 : vector<2x32xf32> to vector<2x32xbf16>
    %546 = arith.truncf %527 : vector<2x32xf32> to vector<2x32xbf16>
    %547 = tpu.concatenate %546, %545 in 1 : vector<2x32xbf16>, vector<2x32xbf16> -> vector<2x64xbf16>
    %cst_51 = arith.constant dense<0.000000e+00> : vector<2x256xf32>
    %548 = tpu.matmul %547, %0, %cst_51 {dimension_numbers = #tpu.dot_dimension_numbers<[1], [0], [0], [1], [0, 0, 1, 1], [], []>} : vector<2x64xbf16>, vector<64x256xbf16>, vector<2x256xf32> -> vector<2x256xf32>
    %549 = vector.extract_strided_slice %548 {offsets = [0, 0], sizes = [2, 128], strides = [1, 1]} : vector<2x256xf32> to vector<2x128xf32>
    %550 = vector.extract_strided_slice %548 {offsets = [0, 128], sizes = [2, 128], strides = [1, 1]} : vector<2x256xf32> to vector<2x128xf32>
    %551 = vector.extract_strided_slice %7 {offsets = [28, 0], sizes = [2, 128], strides = [1, 1]} : vector<32x128xf32> to vector<2x128xf32>
    %552 = arith.addf %551, %549 : vector<2x128xf32>
    %553 = arith.negf %552 : vector<2x128xf32>
    %554 = math.exp %553 : vector<2x128xf32>
    %cst_52 = arith.constant 1.000000e+00 : f32
    %555 = vector.broadcast %cst_52 : f32 to vector<2x128xf32>
    %556 = arith.addf %555, %554 : vector<2x128xf32>
    %557 = arith.divf %555, %556 : vector<2x128xf32>
    %558 = math.tanh %552 : vector<2x128xf32>
    %559 = vector.extract_strided_slice %557 {offsets = [0, 0], sizes = [2, 32], strides = [1, 1]} : vector<2x128xf32> to vector<2x32xf32>
    %560 = vector.extract_strided_slice %557 {offsets = [0, 32], sizes = [2, 32], strides = [1, 1]} : vector<2x128xf32> to vector<2x32xf32>
    %561 = vector.extract_strided_slice %558 {offsets = [0, 64], sizes = [2, 32], strides = [1, 1]} : vector<2x128xf32> to vector<2x32xf32>
    %562 = vector.extract_strided_slice %557 {offsets = [0, 96], sizes = [2, 32], strides = [1, 1]} : vector<2x128xf32> to vector<2x32xf32>
    %563 = arith.mulf %560, %525 : vector<2x32xf32>
    %564 = arith.mulf %559, %561 : vector<2x32xf32>
    %565 = arith.addf %563, %564 : vector<2x32xf32>
    %566 = math.tanh %565 : vector<2x32xf32>
    %567 = arith.mulf %562, %566 : vector<2x32xf32>
    %568 = vector.broadcast %1 : vector<1x128xf32> to vector<2x128xf32>
    %569 = arith.addf %550, %568 : vector<2x128xf32>
    %570 = arith.negf %569 : vector<2x128xf32>
    %571 = math.exp %570 : vector<2x128xf32>
    %cst_53 = arith.constant 1.000000e+00 : f32
    %572 = vector.broadcast %cst_53 : f32 to vector<2x128xf32>
    %573 = arith.addf %572, %571 : vector<2x128xf32>
    %574 = arith.divf %572, %573 : vector<2x128xf32>
    %575 = math.tanh %569 : vector<2x128xf32>
    %576 = vector.extract_strided_slice %574 {offsets = [0, 0], sizes = [2, 32], strides = [1, 1]} : vector<2x128xf32> to vector<2x32xf32>
    %577 = vector.extract_strided_slice %574 {offsets = [0, 32], sizes = [2, 32], strides = [1, 1]} : vector<2x128xf32> to vector<2x32xf32>
    %578 = vector.extract_strided_slice %575 {offsets = [0, 64], sizes = [2, 32], strides = [1, 1]} : vector<2x128xf32> to vector<2x32xf32>
    %579 = vector.extract_strided_slice %574 {offsets = [0, 96], sizes = [2, 32], strides = [1, 1]} : vector<2x128xf32> to vector<2x32xf32>
    %580 = arith.mulf %577, %542 : vector<2x32xf32>
    %581 = arith.mulf %576, %578 : vector<2x32xf32>
    %582 = arith.addf %580, %581 : vector<2x32xf32>
    %583 = math.tanh %582 : vector<2x32xf32>
    %584 = arith.mulf %579, %583 : vector<2x32xf32>
    %585 = arith.truncf %584 : vector<2x32xf32> to vector<2x32xbf16>
    %586 = arith.truncf %567 : vector<2x32xf32> to vector<2x32xbf16>
    %587 = tpu.concatenate %586, %585 in 1 : vector<2x32xbf16>, vector<2x32xbf16> -> vector<2x64xbf16>
    %cst_54 = arith.constant dense<0.000000e+00> : vector<2x256xf32>
    %588 = tpu.matmul %587, %0, %cst_54 {dimension_numbers = #tpu.dot_dimension_numbers<[1], [0], [0], [1], [0, 0, 1, 1], [], []>} : vector<2x64xbf16>, vector<64x256xbf16>, vector<2x256xf32> -> vector<2x256xf32>
    %589 = vector.extract_strided_slice %588 {offsets = [0, 0], sizes = [2, 128], strides = [1, 1]} : vector<2x256xf32> to vector<2x128xf32>
    %590 = vector.extract_strided_slice %588 {offsets = [0, 128], sizes = [2, 128], strides = [1, 1]} : vector<2x256xf32> to vector<2x128xf32>
    %591 = vector.extract_strided_slice %7 {offsets = [30, 0], sizes = [2, 128], strides = [1, 1]} : vector<32x128xf32> to vector<2x128xf32>
    %592 = arith.addf %591, %589 : vector<2x128xf32>
    %593 = arith.negf %592 : vector<2x128xf32>
    %594 = math.exp %593 : vector<2x128xf32>
    %cst_55 = arith.constant 1.000000e+00 : f32
    %595 = vector.broadcast %cst_55 : f32 to vector<2x128xf32>
    %596 = arith.addf %595, %594 : vector<2x128xf32>
    %597 = arith.divf %595, %596 : vector<2x128xf32>
    %598 = math.tanh %592 : vector<2x128xf32>
    %599 = vector.extract_strided_slice %597 {offsets = [0, 0], sizes = [2, 32], strides = [1, 1]} : vector<2x128xf32> to vector<2x32xf32>
    %600 = vector.extract_strided_slice %597 {offsets = [0, 32], sizes = [2, 32], strides = [1, 1]} : vector<2x128xf32> to vector<2x32xf32>
    %601 = vector.extract_strided_slice %598 {offsets = [0, 64], sizes = [2, 32], strides = [1, 1]} : vector<2x128xf32> to vector<2x32xf32>
    %602 = vector.extract_strided_slice %597 {offsets = [0, 96], sizes = [2, 32], strides = [1, 1]} : vector<2x128xf32> to vector<2x32xf32>
    %603 = arith.mulf %600, %565 : vector<2x32xf32>
    %604 = arith.mulf %599, %601 : vector<2x32xf32>
    %605 = arith.addf %603, %604 : vector<2x32xf32>
    %606 = math.tanh %605 : vector<2x32xf32>
    %607 = arith.mulf %602, %606 : vector<2x32xf32>
    %608 = vector.broadcast %1 : vector<1x128xf32> to vector<2x128xf32>
    %609 = arith.addf %590, %608 : vector<2x128xf32>
    %610 = arith.negf %609 : vector<2x128xf32>
    %611 = math.exp %610 : vector<2x128xf32>
    %cst_56 = arith.constant 1.000000e+00 : f32
    %612 = vector.broadcast %cst_56 : f32 to vector<2x128xf32>
    %613 = arith.addf %612, %611 : vector<2x128xf32>
    %614 = arith.divf %612, %613 : vector<2x128xf32>
    %615 = math.tanh %609 : vector<2x128xf32>
    %616 = vector.extract_strided_slice %614 {offsets = [0, 0], sizes = [2, 32], strides = [1, 1]} : vector<2x128xf32> to vector<2x32xf32>
    %617 = vector.extract_strided_slice %614 {offsets = [0, 32], sizes = [2, 32], strides = [1, 1]} : vector<2x128xf32> to vector<2x32xf32>
    %618 = vector.extract_strided_slice %615 {offsets = [0, 64], sizes = [2, 32], strides = [1, 1]} : vector<2x128xf32> to vector<2x32xf32>
    %619 = vector.extract_strided_slice %614 {offsets = [0, 96], sizes = [2, 32], strides = [1, 1]} : vector<2x128xf32> to vector<2x32xf32>
    %620 = arith.mulf %617, %582 : vector<2x32xf32>
    %621 = arith.mulf %616, %618 : vector<2x32xf32>
    %622 = arith.addf %620, %621 : vector<2x32xf32>
    %623 = math.tanh %622 : vector<2x32xf32>
    %624 = arith.mulf %619, %623 : vector<2x32xf32>
    %625 = arith.truncf %624 : vector<2x32xf32> to vector<2x32xbf16>
    %626 = arith.truncf %607 : vector<2x32xf32> to vector<2x32xbf16>
    %627 = tpu.concatenate %626, %625 in 1 : vector<2x32xbf16>, vector<2x32xbf16> -> vector<2x64xbf16>
    %cst_57 = arith.constant dense<0.000000e+00> : vector<2x256xf32>
    %628 = tpu.matmul %627, %0, %cst_57 {dimension_numbers = #tpu.dot_dimension_numbers<[1], [0], [0], [1], [0, 0, 1, 1], [], []>} : vector<2x64xbf16>, vector<64x256xbf16>, vector<2x256xf32> -> vector<2x256xf32>
    %629 = vector.extract_strided_slice %628 {offsets = [0, 128], sizes = [2, 128], strides = [1, 1]} : vector<2x256xf32> to vector<2x128xf32>
    %630 = vector.broadcast %1 : vector<1x128xf32> to vector<2x128xf32>
    %631 = arith.addf %629, %630 : vector<2x128xf32>
    %632 = arith.negf %631 : vector<2x128xf32>
    %633 = math.exp %632 : vector<2x128xf32>
    %cst_58 = arith.constant 1.000000e+00 : f32
    %634 = vector.broadcast %cst_58 : f32 to vector<2x128xf32>
    %635 = arith.addf %634, %633 : vector<2x128xf32>
    %636 = arith.divf %634, %635 : vector<2x128xf32>
    %637 = math.tanh %631 : vector<2x128xf32>
    %638 = vector.extract_strided_slice %636 {offsets = [0, 0], sizes = [2, 32], strides = [1, 1]} : vector<2x128xf32> to vector<2x32xf32>
    %639 = vector.extract_strided_slice %636 {offsets = [0, 32], sizes = [2, 32], strides = [1, 1]} : vector<2x128xf32> to vector<2x32xf32>
    %640 = vector.extract_strided_slice %637 {offsets = [0, 64], sizes = [2, 32], strides = [1, 1]} : vector<2x128xf32> to vector<2x32xf32>
    %641 = vector.extract_strided_slice %636 {offsets = [0, 96], sizes = [2, 32], strides = [1, 1]} : vector<2x128xf32> to vector<2x32xf32>
    %642 = arith.mulf %639, %622 : vector<2x32xf32>
    %643 = arith.mulf %638, %640 : vector<2x32xf32>
    %644 = arith.addf %642, %643 : vector<2x32xf32>
    %645 = math.tanh %644 : vector<2x32xf32>
    %646 = arith.mulf %641, %645 : vector<2x32xf32>
    %c0_59 = arith.constant 0 : index
    %c0_60 = arith.constant 0 : index
    %647 = vector.load %arg5[%c0_59, %c0_60] : memref<32x128xf32, #tpu.memory_space<vmem>>, vector<32x128xf32>
    %cst_61 = arith.constant dense<0.000000e+00> : vector<2x128xf32>
    %648 = tpu.matmul %646, %647, %cst_61 {dimension_numbers = #tpu.dot_dimension_numbers<[1], [0], [0], [1], [0, 0, 1, 1], [], []>} : vector<2x32xf32>, vector<32x128xf32>, vector<2x128xf32> -> vector<2x128xf32>
    %c0_62 = arith.constant 0 : index
    %c0_63 = arith.constant 0 : index
    %649 = vector.load %arg6[%c0_62, %c0_63] : memref<1x128xf32, #tpu.memory_space<vmem>>, vector<1x128xf32>
    %650 = vector.broadcast %649 : vector<1x128xf32> to vector<2x128xf32>
    %651 = arith.addf %648, %650 : vector<2x128xf32>
    %c0_64 = arith.constant 0 : index
    %c0_65 = arith.constant 0 : index
    %652 = vector.load %arg7[%c0_64, %c0_65] : memref<2x128xf32, #tpu.memory_space<vmem>>, vector<2x128xf32>
    tpu.vector_store %arg7[%c0_64, %c0_65], %651 {strides = array<i32>} : memref<2x128xf32, #tpu.memory_space<vmem>>, vector<2x128xf32>,
    return
  }
}

</mosaic_0001>

<llo_original>
// kernel: lstm_classify_forward.1
$region0: #{lstm_classify_forward.1}
  #allocation0 [shape = 'u32[]', space=smem, size = 0x4, offset = 0x4, fixed_abs, tag = 'smem constant byte address 0x4 - core index']
  #allocation1 [shape = 'u32[144,128]{1,0:T(1,128)}', space=vmem, size = 0x12000, scoped, tag = 'internal scratch']
  %s0 = inlined_call_operand.vmem [shape: bf16[32,64], index: 0, kind: input, shape index: {}]
  %s1 = inlined_call_operand.vmem [shape: bf16[64,128], index: 1, kind: input, shape index: {}]
  %s2 = inlined_call_operand.vmem [shape: f32[1,128], index: 2, kind: input, shape index: {}]
  %s3 = inlined_call_operand.vmem [shape: bf16[64,256], index: 3, kind: input, shape index: {}]
  %s4 = inlined_call_operand.vmem [shape: f32[1,128], index: 4, kind: input, shape index: {}]
  %s5 = inlined_call_operand.vmem [shape: f32[32,128], index: 5, kind: input, shape index: {}]
  %s6 = inlined_call_operand.vmem [shape: f32[1,128], index: 6, kind: input, shape index: {}]
  %s7 = inlined_call_operand.hbm [shape: f32[2,128], index: 7, kind: output, shape index: {}]
  %s8 = sld [smem:[#allocation0]]
  $region38: #{lstm_classify_forward.1} parent=0
    _
  %s10 = ssub.s32 1, %s8
  %s11 = scalar_select 0, %s10, %s8
  $region1: #{lstm_classify_forward.1} parent=0
    #allocation2 [shape = 'u8[1024]{0}', space=vmem, size = 0x400, scoped, tag = 'output window, operand 0, single buffered']
    #allocation3 [shape = 's32[1]{0}', space=sflag, size = 0x4, scoped, tag = 'scoped memory for lstm_classify_forward.1']
    %12 = vsyncpa [#allocation3], 0
    // Predicated region
    $region2: #{lstm_classify_forward.1} parent=1 // pred_check
      _
    $region3: #{lstm_classify_forward.1} parent=1 // pred_check_branch
      %14 = sbr.rel (0) target = $region5
    $region4: #{lstm_classify_forward.1} parent=1 // pred_region
      _
    $region5: #{lstm_classify_forward.1} parent=1 // pred_fallthru
      _
    // Predicated region
    $region6: #{lstm_classify_forward.1} parent=1 // pred_check
      _
    $region7: #{lstm_classify_forward.1} parent=1 // pred_check_branch
      %16 = sbr.rel (0) target = $region9
    $region8: #{lstm_classify_forward.1} parent=1 // pred_region
      _
    $region9: #{lstm_classify_forward.1} parent=1 // pred_fallthru
      _
    // Predicated region
    $region10: #{lstm_classify_forward.1} parent=1 // pred_check
      _
    $region11: #{lstm_classify_forward.1} parent=1 // pred_check_branch
      %18 = sbr.rel (0) target = $region13
    $region12: #{lstm_classify_forward.1} parent=1 // pred_region
      _
    $region13: #{lstm_classify_forward.1} parent=1 // pred_fallthru
      _
    // Predicated region
    $region14: #{lstm_classify_forward.1} parent=1 // pred_check
      _
    $region15: #{lstm_classify_forward.1} parent=1 // pred_check_branch
      %20 = sbr.rel (0) target = $region17
    $region16: #{lstm_classify_forward.1} parent=1 // pred_region
      _
    $region17: #{lstm_classify_forward.1} parent=1 // pred_fallthru
      _
    // Predicated region
    $region18: #{lstm_classify_forward.1} parent=1 // pred_check
      _
    $region19: #{lstm_classify_forward.1} parent=1 // pred_check_branch
      %22 = sbr.rel (0) target = $region21
    $region20: #{lstm_classify_forward.1} parent=1 // pred_region
      _
    $region21: #{lstm_classify_forward.1} parent=1 // pred_fallthru
      _
    // Predicated region
    $region22: #{lstm_classify_forward.1} parent=1 // pred_check
      _
    $region23: #{lstm_classify_forward.1} parent=1 // pred_check_branch
      %24 = sbr.rel (0) target = $region25
    $region24: #{lstm_classify_forward.1} parent=1 // pred_region
      _
    $region25: #{lstm_classify_forward.1} parent=1 // pred_fallthru
      _
    // Predicated region
    $region26: #{lstm_classify_forward.1} parent=1 // pred_check
      _
    $region27: #{lstm_classify_forward.1} parent=1 // pred_check_branch
      %26 = sbr.rel (0) target = $region29
    $region28: #{lstm_classify_forward.1} parent=1 // pred_region
      _
    $region29: #{lstm_classify_forward.1} parent=1 // pred_fallthru
      _
    %v28 = vld [vmem:[%s3] sm:$0xff]
    %v29 = vld [vmem:[%s3 + $0x8] sm:$0xff]
    %v30 = vld [vmem:[%s3 + $0x10] sm:$0xff]
    %v31 = vld [vmem:[%s3 + $0x18] sm:$0xff]
    %v32 = vld [vmem:[%s3 + $0x20] sm:$0xff]
    %v33 = vld [vmem:[%s3 + $0x28] sm:$0xff]
    %v34 = vld [vmem:[%s3 + $0x30] sm:$0xff]
    %v35 = vld [vmem:[%s3 + $0x38] sm:$0xff]
    %v36 = vld [vmem:[%s4] sm:$0x1]
    %v37 = vld [vmem:[%s0] sm:$0xf]
    %v38 = vld [vmem:[%s0 + $0x4] sm:$0xf]
    %v39 = vld [vmem:[%s0 + $0x8] sm:$0xf]
    %v40 = vld [vmem:[%s0 + $0xc] sm:$0xf]
    %v41 = vld [vmem:[%s1] sm:$0xf]
    %v42 = vld [vmem:[%s1 + $0x4] sm:$0xf]
    %v43 = vld [vmem:[%s1 + $0x8] sm:$0xf]
    %v44 = vld [vmem:[%s1 + $0xc] sm:$0xf]
    %v45 = vld [vmem:[%s1 + $0x10] sm:$0xf]
    %v46 = vld [vmem:[%s1 + $0x14] sm:$0xf]
    %v47 = vld [vmem:[%s1 + $0x18] sm:$0xf]
    %v48 = vld [vmem:[%s1 + $0x1c] sm:$0xf]
    %v49 = vld [vmem:[%s2] sm:$0x1]
    %v51 = vlaneseq
    %v52 = vshrl.u32 %v51, 7
    %v53 = vsub.s32 0, %v52
    %v54 = vrot.slane %v49, %v53
    %v60 = vunpack.c.l.b16 %v37
    %v61 = vunpack.c.l.b16 %v38
    %v62 = vunpack.c.l.b16 %v39
    %v63 = vunpack.c.l.b16 %v40
    %v64 = vpack.c.b16 %v61, %v60
    %v65 = vpack.c.b16 %v63, %v62
    %v74 = vunpack.c.l.b16 %v41
    %v75 = vunpack.c.l.b16 %v42
    %v76 = vunpack.c.l.b16 %v43
    %v77 = vunpack.c.l.b16 %v44
    %v78 = vunpack.c.l.b16 %v45
    %v79 = vunpack.c.l.b16 %v46
    %v80 = vunpack.c.l.b16 %v47
    %v81 = vunpack.c.l.b16 %v48
    %v82 = vpack.c.b16 %v75, %v74
    %v83 = vpack.c.b16 %v77, %v76
    %v84 = vpack.c.b16 %v79, %v78
    %v85 = vpack.c.b16 %v81, %v80
    %vm90 = vcmask 523264
    %v92 = vsel %vm90, %v64, 0
    %v95 = vsel %vm90, %v65, 0
    %97 = vmatprep.subr.bf16.mxu0 0
    %98 = vmatpush1.bf16.msra.mxu0 0
    %99 = vmatprep.subr.bf16.mxu0 0
    %100 = vmatpush1.bf16.msra.mxu0 0
    %101 = vmatprep.subr.bf16.mxu0 0
    %102 = vmatpush1.bf16.msra.mxu0 0
    %103 = vmatprep.subr.bf16.mxu0 0
    %104 = vmatpush1.bf16.msra.mxu0 0
    %105 = vmatprep.subr.bf16.mxu0 0
    %106 = vmatpush1.bf16.msra.mxu0 %v85
    %107 = vmatprep.subr.bf16.mxu0 0
    %108 = vmatpush1.bf16.msra.mxu0 %v84
    %109 = vmatprep.subr.bf16.mxu0 0
    %110 = vmatpush1.bf16.msra.mxu0 %v83
    %111 = vmatprep.subr.bf16.mxu0 0
    %112 = vmatpush1.bf16.msra.mxu0 %v82
    %113 = vmatprep.subr.bf16.mxu0 0
    %114 = vmatpush2.bf16.msra.mxu0 0
    %115 = vmatprep.subr.bf16.mxu0 0
    %116 = vmatpush2.bf16.msra.mxu0 0
    %117 = vmatprep.subr.bf16.mxu0 0
    %118 = vmatpush2.bf16.msra.mxu0 0
    %119 = vmatprep.subr.bf16.mxu0 0
    %120 = vmatpush2.bf16.msra.mxu0 0
    %121 = vmatprep.subr.bf16.mxu0 0
    %122 = vmatpush2.bf16.msra.mxu0 0
    %123 = vmatprep.subr.bf16.mxu0 0
    %124 = vmatpush2.bf16.msra.mxu0 0
    %125 = vmatprep.subr.bf16.mxu0 0
    %126 = vmatpush2.bf16.msra.mxu0 0
    %127 = vmatprep.subr.bf16.mxu0 0
    %128 = vmatpush2.bf16.msra.mxu0 0
    %129 = vmatprep.mubr.bf16.mxu0 0
    %130 = vmatmul.mubr.bf16.gmra.mxu0 %v92
    %v131 = vpop.f32.mrf.mxu0
    %v132 = vadd.f32 %v54, %v131
    %v133 = vpop.f32.mrf.mxu0
    %v134 = vpop.f32.mrf.mxu0
    %v135 = vadd.f32 %v54, %v134
    %v136 = vpop.f32.mrf.mxu0
    %137 = vmatprep.mubr.bf16.mxu0 0
    %138 = vmatmul.mubr.bf16.gmra.mxu0 %v95
    %v139 = vpop.f32.mrf.mxu0
    %v140 = vadd.f32 %v54, %v139
    %v141 = vpop.f32.mrf.mxu0
    %v142 = vpop.f32.mrf.mxu0
    %v143 = vadd.f32 %v54, %v142
    %v144 = vpop.f32.mrf.mxu0
    %145 = vdwg.mxu0
    %v146 = vxor.u32 %v132, 2147483648
    %v147 = vmul.f32 %v146, 1.442695
    %v148 = vpow.pop %v147
    %v149 = vadd.f32 %v148, 1.0
    %v150 = vrcp.pop %v149
    %v151 = vmul.f32 1.0, %v150
    %v152 = vtanh.pop %v132
    %v153 = vmul.f32 %v151, 0.0
    %155 = vrot.lane.b32.xlu0 %v152, 64
    %v156 = vpop.permute.xlu0 %155
    %v158 = vmul.f32 %v151, %v156
    %160 = vrot.lane.b32.xlu0 %v158, 32
    %v161 = vpop.permute.xlu0 %160
    %v163 = vadd.f32 %v153, %v161
    %v164 = vtanh.pop %v163
    %166 = vrot.lane.b32.xlu0 %v164, 64
    %v167 = vpop.permute.xlu0 %166
    %v169 = vmul.f32 %v151, %v167
    %v170 = vpack.c.bf16 %v169, %v169
    %172 = vrot.lane.b32.xlu0 %v170, 32
    %v173 = vpop.permute.xlu0 %172
    %vm174 = vcmask 261120
    %v177 = vsel %vm174, %v173, 0
    %v186 = vunpack.c.l.b16 %v28
    %v187 = vunpack.c.h.b16 %v28
    %v188 = vunpack.c.l.b16 %v29
    %v189 = vunpack.c.h.b16 %v29
    %v190 = vunpack.c.l.b16 %v30
    %v191 = vunpack.c.h.b16 %v30
    %v192 = vunpack.c.l.b16 %v31
    %v193 = vunpack.c.h.b16 %v31
    %v194 = vunpack.c.l.b16 %v32
    %v195 = vunpack.c.h.b16 %v32
    %v196 = vunpack.c.l.b16 %v33
    %v197 = vunpack.c.h.b16 %v33
    %v198 = vunpack.c.l.b16 %v34
    %v199 = vunpack.c.h.b16 %v34
    %v200 = vunpack.c.l.b16 %v35
    %v201 = vunpack.c.h.b16 %v35
    %v202 = vpack.c.b16 %v188, %v186
    %v203 = vpack.c.b16 %v189, %v187
    %v204 = vpack.c.b16 %v192, %v190
    %v205 = vpack.c.b16 %v193, %v191
    %v206 = vpack.c.b16 %v196, %v194
    %v207 = vpack.c.b16 %v197, %v195
    %v208 = vpack.c.b16 %v200, %v198
    %v209 = vpack.c.b16 %v201, %v199
    %v218 = vsel %vm90, %v177, 0
    %220 = vmatprep.subr.bf16.mxu0 0
    %221 = vmatpush1.bf16.msra.mxu0 0
    %222 = vmatprep.subr.bf16.mxu0 0
    %223 = vmatpush1.bf16.msra.mxu0 0
    %224 = vmatprep.subr.bf16.mxu0 0
    %225 = vmatpush1.bf16.msra.mxu0 0
    %226 = vmatprep.subr.bf16.mxu0 0
    %227 = vmatpush1.bf16.msra.mxu0 0
    %228 = vmatprep.subr.bf16.mxu0 %v209
    %229 = vmatpush1.bf16.msra.mxu0 %v208
    %230 = vmatprep.subr.bf16.mxu0 %v207
    %231 = vmatpush1.bf16.msra.mxu0 %v206
    %232 = vmatprep.subr.bf16.mxu0 %v205
    %233 = vmatpush1.bf16.msra.mxu0 %v204
    %234 = vmatprep.subr.bf16.mxu0 %v203
    %235 = vmatpush1.bf16.msra.mxu0 %v202
    %236 = vmatprep.subr.bf16.mxu0 0
    %237 = vmatpush2.bf16.msra.mxu0 0
    %238 = vmatprep.subr.bf16.mxu0 0
    %239 = vmatpush2.bf16.msra.mxu0 0
    %240 = vmatprep.subr.bf16.mxu0 0
    %241 = vmatpush2.bf16.msra.mxu0 0
    %242 = vmatprep.subr.bf16.mxu0 0
    %243 = vmatpush2.bf16.msra.mxu0 0
    %244 = vmatprep.subr.bf16.mxu0 0
    %245 = vmatpush2.bf16.msra.mxu0 0
    %246 = vmatprep.subr.bf16.mxu0 0
    %247 = vmatpush2.bf16.msra.mxu0 0
    %248 = vmatprep.subr.bf16.mxu0 0
    %249 = vmatpush2.bf16.msra.mxu0 0
    %250 = vmatprep.subr.bf16.mxu0 0
    %251 = vmatpush2.bf16.msra.mxu0 0
    %252 = vmatprep.mubr.bf16.mxu0 0
    %253 = vmatmul.mubr.bf16.gmra.mxu0 %v218
    %v254 = vpop.f32.mrf.mxu0
    %v255 = vadd.f32 0.0, %v254
    %v256 = vpop.f32.mrf.mxu0
    %v257 = vadd.f32 0.0, %v256
    %v258 = vpop.f32.mrf.mxu0
    %v259 = vpop.f32.mrf.mxu0
    %260 = vdwg.mxu0
    %v262 = vrot.slane %v255, 6
    %v264 = vadd.f32 %v132, %v262
    %v265 = vxor.u32 %v264, 2147483648
    %v266 = vmul.f32 %v265, 1.442695
    %v267 = vpow.pop %v266
    %v268 = vadd.f32 %v267, 1.0
    %v269 = vrcp.pop %v268
    %v270 = vmul.f32 1.0, %v269
    %v271 = vtanh.pop %v264
    %v273 = vrot.slane %v163, 6
    %v275 = vmul.f32 %v270, %v273
    %277 = vrot.lane.b32.xlu0 %v271, 64
    %v278 = vpop.permute.xlu0 %277
    %v280 = vmul.f32 %v270, %v278
    %282 = vrot.lane.b32.xlu0 %v280, 32
    %v283 = vpop.permute.xlu0 %282
    %v285 = vadd.f32 %v275, %v283
    %v286 = vtanh.pop %v285
    %288 = vrot.lane.b32.xlu0 %v286, 64
    %v289 = vpop.permute.xlu0 %288
    %v291 = vmul.f32 %v270, %v289
    %v293 = vlaneseq
    %v294 = vshrl.u32 %v293, 7
    %v295 = vsub.s32 0, %v294
    %v296 = vrot.slane %v36, %v295
    %v298 = vadd.f32 %v257, %v296
    %v299 = vxor.u32 %v298, 2147483648
    %v300 = vmul.f32 %v299, 1.442695
    %v301 = vpow.pop %v300
    %v302 = vadd.f32 %v301, 1.0
    %v303 = vrcp.pop %v302
    %v304 = vmul.f32 1.0, %v303
    %v305 = vtanh.pop %v298
    %v306 = vmul.f32 %v304, 0.0
    %308 = vrot.lane.b32.xlu0 %v305, 64
    %v309 = vpop.permute.xlu0 %308
    %v311 = vmul.f32 %v304, %v309
    %313 = vrot.lane.b32.xlu0 %v311, 32
    %v314 = vpop.permute.xlu0 %313
    %v316 = vadd.f32 %v306, %v314
    %v317 = vtanh.pop %v316
    %319 = vrot.lane.b32.xlu0 %v317, 64
    %v320 = vpop.permute.xlu0 %319
    %v322 = vmul.f32 %v304, %v320
    %v323 = vpack.c.bf16 %v322, %v322
    %v324 = vpack.c.bf16 %v291, %v291
    %326 = vrot.lane.b32.xlu0 %v324, 32
    %v327 = vpop.permute.xlu0 %326
    %v329 = vrot.slane %v323, 7
    %330 = vrot.lane.b32.xlu0 %v329, 64
    %v331 = vpop.permute.xlu0 %330
    %v334 = vsel %vm174, %v327, %v331
    %v336 = vrot.slane %v334, 1
    %v338 = vsel %vm90, %v336, 0
    %340 = vmatprep.subr.bf16.mxu0 0
    %341 = vmatpush1.bf16.msra.mxu0 0
    %342 = vmatprep.subr.bf16.mxu0 0
    %343 = vmatpush1.bf16.msra.mxu0 0
    %344 = vmatprep.subr.bf16.mxu0 0
    %345 = vmatpush1.bf16.msra.mxu0 0
    %346 = vmatprep.subr.bf16.mxu0 0
    %347 = vmatpush1.bf16.msra.mxu0 0
    %348 = vmatprep.subr.bf16.mxu0 %v209
    %349 = vmatpush1.bf16.msra.mxu0 %v208
    %350 = vmatprep.subr.bf16.mxu0 %v207
    %351 = vmatpush1.bf16.msra.mxu0 %v206
    %352 = vmatprep.subr.bf16.mxu0 %v205
    %353 = vmatpush1.bf16.msra.mxu0 %v204
    %354 = vmatprep.subr.bf16.mxu0 %v203
    %355 = vmatpush1.bf16.msra.mxu0 %v202
    %356 = vmatprep.subr.bf16.mxu0 0
    %357 = vmatpush2.bf16.msra.mxu0 0
    %358 = vmatprep.subr.bf16.mxu0 0
    %359 = vmatpush2.bf16.msra.mxu0 0
    %360 = vmatprep.subr.bf16.mxu0 0
    %361 = vmatpush2.bf16.msra.mxu0 0
    %362 = vmatprep.subr.bf16.mxu0 0
    %363 = vmatpush2.bf16.msra.mxu0 0
    %364 = vmatprep.subr.bf16.mxu0 0
    %365 = vmatpush2.bf16.msra.mxu0 0
    %366 = vmatprep.subr.bf16.mxu0 0
    %367 = vmatpush2.bf16.msra.mxu0 0
    %368 = vmatprep.subr.bf16.mxu0 0
    %369 = vmatpush2.bf16.msra.mxu0 0
    %370 = vmatprep.subr.bf16.mxu0 0
    %371 = vmatpush2.bf16.msra.mxu0 0
    %372 = vmatprep.mubr.bf16.mxu0 0
    %373 = vmatmul.mubr.bf16.gmra.mxu0 %v338
    %v374 = vpop.f32.mrf.mxu0
    %v375 = vadd.f32 0.0, %v374
    %v376 = vpop.f32.mrf.mxu0
    %v377 = vadd.f32 0.0, %v376
    %v378 = vpop.f32.mrf.mxu0
    %v379 = vpop.f32.mrf.mxu0
    %380 = vdwg.mxu0
    %v382 = vrot.slane %v375, 4
    %v384 = vadd.f32 %v132, %v382
    %v385 = vxor.u32 %v384, 2147483648
    %v386 = vmul.f32 %v385, 1.442695
    %v387 = vpow.pop %v386
    %v388 = vadd.f32 %v387, 1.0
    %v389 = vrcp.pop %v388
    %v390 = vmul.f32 1.0, %v389
    %v391 = vtanh.pop %v384
    %v393 = vrot.slane %v285, 6
    %v395 = vmul.f32 %v390, %v393
    %397 = vrot.lane.b32.xlu0 %v391, 64
    %v398 = vpop.permute.xlu0 %397
    %v400 = vmul.f32 %v390, %v398
    %402 = vrot.lane.b32.xlu0 %v400, 32
    %v403 = vpop.permute.xlu0 %402
    %v405 = vadd.f32 %v395, %v403
    %v406 = vtanh.pop %v405
    %408 = vrot.lane.b32.xlu0 %v406, 64
    %v409 = vpop.permute.xlu0 %408
    %v411 = vmul.f32 %v390, %v409
    %v412 = vadd.f32 %v377, %v296
    %v413 = vxor.u32 %v412, 2147483648
    %v414 = vmul.f32 %v413, 1.442695
    %v415 = vpow.pop %v414
    %v416 = vadd.f32 %v415, 1.0
    %v417 = vrcp.pop %v416
    %v418 = vmul.f32 1.0, %v417
    %v419 = vtanh.pop %v412
    %v420 = vmul.f32 %v418, %v316
    %422 = vrot.lane.b32.xlu0 %v419, 64
    %v423 = vpop.permute.xlu0 %422
    %v425 = vmul.f32 %v418, %v423
    %427 = vrot.lane.b32.xlu0 %v425, 32
    %v428 = vpop.permute.xlu0 %427
    %v430 = vadd.f32 %v420, %v428
    %v431 = vtanh.pop %v430
    %433 = vrot.lane.b32.xlu0 %v431, 64
    %v434 = vpop.permute.xlu0 %433
    %v436 = vmul.f32 %v418, %v434
    %v437 = vpack.c.bf16 %v436, %v436
    %v438 = vpack.c.bf16 %v411, %v411
    %440 = vrot.lane.b32.xlu0 %v438, 32
    %v441 = vpop.permute.xlu0 %440
    %v443 = vrot.slane %v437, 6
    %444 = vrot.lane.b32.xlu0 %v443, 64
    %v445 = vpop.permute.xlu0 %444
    %v448 = vsel %vm174, %v441, %v445
    %v450 = vrot.slane %v448, 2
    %v452 = vsel %vm90, %v450, 0
    %454 = vmatprep.subr.bf16.mxu0 0
    %455 = vmatpush1.bf16.msra.mxu0 0
    %456 = vmatprep.subr.bf16.mxu0 0
    %457 = vmatpush1.bf16.msra.mxu0 0
    %458 = vmatprep.subr.bf16.mxu0 0
    %459 = vmatpush1.bf16.msra.mxu0 0
    %460 = vmatprep.subr.bf16.mxu0 0
    %461 = vmatpush1.bf16.msra.mxu0 0
    %462 = vmatprep.subr.bf16.mxu0 %v209
    %463 = vmatpush1.bf16.msra.mxu0 %v208
    %464 = vmatprep.subr.bf16.mxu0 %v207
    %465 = vmatpush1.bf16.msra.mxu0 %v206
    %466 = vmatprep.subr.bf16.mxu0 %v205
    %467 = vmatpush1.bf16.msra.mxu0 %v204
    %468 = vmatprep.subr.bf16.mxu0 %v203
    %469 = vmatpush1.bf16.msra.mxu0 %v202
    %470 = vmatprep.subr.bf16.mxu0 0
    %471 = vmatpush2.bf16.msra.mxu0 0
    %472 = vmatprep.subr.bf16.mxu0 0
    %473 = vmatpush2.bf16.msra.mxu0 0
    %474 = vmatprep.subr.bf16.mxu0 0
    %475 = vmatpush2.bf16.msra.mxu0 0
    %476 = vmatprep.subr.bf16.mxu0 0
    %477 = vmatpush2.bf16.msra.mxu0 0
    %478 = vmatprep.subr.bf16.mxu0 0
    %479 = vmatpush2.bf16.msra.mxu0 0
    %480 = vmatprep.subr.bf16.mxu0 0
    %481 = vmatpush2.bf16.msra.mxu0 0
    %482 = vmatprep.subr.bf16.mxu0 0
    %483 = vmatpush2.bf16.msra.mxu0 0
    %484 = vmatprep.subr.bf16.mxu0 0
    %485 = vmatpush2.bf16.msra.mxu0 0
    %486 = vmatprep.mubr.bf16.mxu0 0
    %487 = vmatmul.mubr.bf16.gmra.mxu0 %v452
    %v488 = vpop.f32.mrf.mxu0
    %v489 = vadd.f32 0.0, %v488
    %v490 = vpop.f32.mrf.mxu0
    %v491 = vadd.f32 0.0, %v490
    %v492 = vpop.f32.mrf.mxu0
    %v493 = vpop.f32.mrf.mxu0
    %494 = vdwg.mxu0
    %v496 = vrot.slane %v489, 2
    %v498 = vadd.f32 %v132, %v496
    %v499 = vxor.u32 %v498, 2147483648
    %v500 = vmul.f32 %v499, 1.442695
    %v501 = vpow.pop %v500
    %v502 = vadd.f32 %v501, 1.0
    %v503 = vrcp.pop %v502
    %v504 = vmul.f32 1.0, %v503
    %v505 = vtanh.pop %v498
    %v507 = vrot.slane %v405, 6
    %v509 = vmul.f32 %v504, %v507
    %511 = vrot.lane.b32.xlu0 %v505, 64
    %v512 = vpop.permute.xlu0 %511
    %v514 = vmul.f32 %v504, %v512
    %516 = vrot.lane.b32.xlu0 %v514, 32
    %v517 = vpop.permute.xlu0 %516
    %v519 = vadd.f32 %v509, %v517
    %v520 = vtanh.pop %v519
    %522 = vrot.lane.b32.xlu0 %v520, 64
    %v523 = vpop.permute.xlu0 %522
    %v525 = vmul.f32 %v504, %v523
    %v526 = vadd.f32 %v491, %v296
    %v527 = vxor.u32 %v526, 2147483648
    %v528 = vmul.f32 %v527, 1.442695
    %v529 = vpow.pop %v528
    %v530 = vadd.f32 %v529, 1.0
    %v531 = vrcp.pop %v530
    %v532 = vmul.f32 1.0, %v531
    %v533 = vtanh.pop %v526
    %v534 = vmul.f32 %v532, %v430
    %536 = vrot.lane.b32.xlu0 %v533, 64
    %v537 = vpop.permute.xlu0 %536
    %v539 = vmul.f32 %v532, %v537
    %541 = vrot.lane.b32.xlu0 %v539, 32
    %v542 = vpop.permute.xlu0 %541
    %v544 = vadd.f32 %v534, %v542
    %v545 = vtanh.pop %v544
    %547 = vrot.lane.b32.xlu0 %v545, 64
    %v548 = vpop.permute.xlu0 %547
    %v550 = vmul.f32 %v532, %v548
    %v551 = vpack.c.bf16 %v550, %v550
    %v552 = vpack.c.bf16 %v525, %v525
    %554 = vrot.lane.b32.xlu0 %v552, 32
    %v555 = vpop.permute.xlu0 %554
    %v557 = vrot.slane %v551, 5
    %558 = vrot.lane.b32.xlu0 %v557, 64
    %v559 = vpop.permute.xlu0 %558
    %v562 = vsel %vm174, %v555, %v559
    %v564 = vrot.slane %v562, 3
    %v566 = vsel %vm90, %v564, 0
    %568 = vmatprep.subr.bf16.mxu0 0
    %569 = vmatpush1.bf16.msra.mxu0 0
    %570 = vmatprep.subr.bf16.mxu0 0
    %571 = vmatpush1.bf16.msra.mxu0 0
    %572 = vmatprep.subr.bf16.mxu0 0
    %573 = vmatpush1.bf16.msra.mxu0 0
    %574 = vmatprep.subr.bf16.mxu0 0
    %575 = vmatpush1.bf16.msra.mxu0 0
    %576 = vmatprep.subr.bf16.mxu0 %v209
    %577 = vmatpush1.bf16.msra.mxu0 %v208
    %578 = vmatprep.subr.bf16.mxu0 %v207
    %579 = vmatpush1.bf16.msra.mxu0 %v206
    %580 = vmatprep.subr.bf16.mxu0 %v205
    %581 = vmatpush1.bf16.msra.mxu0 %v204
    %582 = vmatprep.subr.bf16.mxu0 %v203
    %583 = vmatpush1.bf16.msra.mxu0 %v202
    %584 = vmatprep.subr.bf16.mxu0 0
    %585 = vmatpush2.bf16.msra.mxu0 0
    %586 = vmatprep.subr.bf16.mxu0 0
    %587 = vmatpush2.bf16.msra.mxu0 0
    %588 = vmatprep.subr.bf16.mxu0 0
    %589 = vmatpush2.bf16.msra.mxu0 0
    %590 = vmatprep.subr.bf16.mxu0 0
    %591 = vmatpush2.bf16.msra.mxu0 0
    %592 = vmatprep.subr.bf16.mxu0 0
    %593 = vmatpush2.bf16.msra.mxu0 0
    %594 = vmatprep.subr.bf16.mxu0 0
    %595 = vmatpush2.bf16.msra.mxu0 0
    %596 = vmatprep.subr.bf16.mxu0 0
    %597 = vmatpush2.bf16.msra.mxu0 0
    %598 = vmatprep.subr.bf16.mxu0 0
    %599 = vmatpush2.bf16.msra.mxu0 0
    %600 = vmatprep.mubr.bf16.mxu0 0
    %601 = vmatmul.mubr.bf16.gmra.mxu0 %v566
    %v602 = vpop.f32.mrf.mxu0
    %v603 = vadd.f32 0.0, %v602
    %v604 = vpop.f32.mrf.mxu0
    %v605 = vadd.f32 0.0, %v604
    %v606 = vpop.f32.mrf.mxu0
    %v607 = vpop.f32.mrf.mxu0
    %608 = vdwg.mxu0
    %v609 = vadd.f32 %v135, %v603
    %v610 = vxor.u32 %v609, 2147483648
    %v611 = vmul.f32 %v610, 1.442695
    %v612 = vpow.pop %v611
    %v613 = vadd.f32 %v612, 1.0
    %v614 = vrcp.pop %v613
    %v615 = vmul.f32 1.0, %v614
    %v616 = vtanh.pop %v609
    %v618 = vrot.slane %v519, 6
    %v620 = vmul.f32 %v615, %v618
    %622 = vrot.lane.b32.xlu0 %v616, 64
    %v623 = vpop.permute.xlu0 %622
    %v625 = vmul.f32 %v615, %v623
    %627 = vrot.lane.b32.xlu0 %v625, 32
    %v628 = vpop.permute.xlu0 %627
    %v630 = vadd.f32 %v620, %v628
    %v631 = vtanh.pop %v630
    %633 = vrot.lane.b32.xlu0 %v631, 64
    %v634 = vpop.permute.xlu0 %633
    %v636 = vmul.f32 %v615, %v634
    %v637 = vadd.f32 %v605, %v296
    %v638 = vxor.u32 %v637, 2147483648
    %v639 = vmul.f32 %v638, 1.442695
    %v640 = vpow.pop %v639
    %v641 = vadd.f32 %v640, 1.0
    %v642 = vrcp.pop %v641
    %v643 = vmul.f32 1.0, %v642
    %v644 = vtanh.pop %v637
    %v645 = vmul.f32 %v643, %v544
    %647 = vrot.lane.b32.xlu0 %v644, 64
    %v648 = vpop.permute.xlu0 %647
    %v650 = vmul.f32 %v643, %v648
    %652 = vrot.lane.b32.xlu0 %v650, 32
    %v653 = vpop.permute.xlu0 %652
    %v655 = vadd.f32 %v645, %v653
    %v656 = vtanh.pop %v655
    %658 = vrot.lane.b32.xlu0 %v656, 64
    %v659 = vpop.permute.xlu0 %658
    %v661 = vmul.f32 %v643, %v659
    %v662 = vpack.c.bf16 %v661, %v661
    %v663 = vpack.c.bf16 %v636, %v636
    %665 = vrot.lane.b32.xlu0 %v663, 32
    %v666 = vpop.permute.xlu0 %665
    %668 = vrot.lane.b32.xlu0 %v662, 64
    %v669 = vpop.permute.xlu0 %668
    %v672 = vsel %vm174, %v666, %v669
    %v673 = vsel %vm90, %v672, 0
    %675 = vmatprep.subr.bf16.mxu0 0
    %676 = vmatpush1.bf16.msra.mxu0 0
    %677 = vmatprep.subr.bf16.mxu0 0
    %678 = vmatpush1.bf16.msra.mxu0 0
    %679 = vmatprep.subr.bf16.mxu0 0
    %680 = vmatpush1.bf16.msra.mxu0 0
    %681 = vmatprep.subr.bf16.mxu0 0
    %682 = vmatpush1.bf16.msra.mxu0 0
    %683 = vmatprep.subr.bf16.mxu0 %v209
    %684 = vmatpush1.bf16.msra.mxu0 %v208
    %685 = vmatprep.subr.bf16.mxu0 %v207
    %686 = vmatpush1.bf16.msra.mxu0 %v206
    %687 = vmatprep.subr.bf16.mxu0 %v205
    %688 = vmatpush1.bf16.msra.mxu0 %v204
    %689 = vmatprep.subr.bf16.mxu0 %v203
    %690 = vmatpush1.bf16.msra.mxu0 %v202
    %691 = vmatprep.subr.bf16.mxu0 0
    %692 = vmatpush2.bf16.msra.mxu0 0
    %693 = vmatprep.subr.bf16.mxu0 0
    %694 = vmatpush2.bf16.msra.mxu0 0
    %695 = vmatprep.subr.bf16.mxu0 0
    %696 = vmatpush2.bf16.msra.mxu0 0
    %697 = vmatprep.subr.bf16.mxu0 0
    %698 = vmatpush2.bf16.msra.mxu0 0
    %699 = vmatprep.subr.bf16.mxu0 0
    %700 = vmatpush2.bf16.msra.mxu0 0
    %701 = vmatprep.subr.bf16.mxu0 0
    %702 = vmatpush2.bf16.msra.mxu0 0
    %703 = vmatprep.subr.bf16.mxu0 0
    %704 = vmatpush2.bf16.msra.mxu0 0
    %705 = vmatprep.subr.bf16.mxu0 0
    %706 = vmatpush2.bf16.msra.mxu0 0
    %707 = vmatprep.mubr.bf16.mxu0 0
    %708 = vmatmul.mubr.bf16.gmra.mxu0 %v673
    %v709 = vpop.f32.mrf.mxu0
    %v710 = vadd.f32 0.0, %v709
    %v711 = vpop.f32.mrf.mxu0
    %v712 = vadd.f32 0.0, %v711
    %v713 = vpop.f32.mrf.mxu0
    %v714 = vpop.f32.mrf.mxu0
    %715 = vdwg.mxu0
    %v717 = vrot.slane %v710, 6
    %v719 = vadd.f32 %v135, %v717
    %v720 = vxor.u32 %v719, 2147483648
    %v721 = vmul.f32 %v720, 1.442695
    %v722 = vpow.pop %v721
    %v723 = vadd.f32 %v722, 1.0
    %v724 = vrcp.pop %v723
    %v725 = vmul.f32 1.0, %v724
    %v726 = vtanh.pop %v719
    %v728 = vrot.slane %v630, 6
    %v730 = vmul.f32 %v725, %v728
    %732 = vrot.lane.b32.xlu0 %v726, 64
    %v733 = vpop.permute.xlu0 %732
    %v735 = vmul.f32 %v725, %v733
    %737 = vrot.lane.b32.xlu0 %v735, 32
    %v738 = vpop.permute.xlu0 %737
    %v740 = vadd.f32 %v730, %v738
    %v741 = vtanh.pop %v740
    %743 = vrot.lane.b32.xlu0 %v741, 64
    %v744 = vpop.permute.xlu0 %743
    %v746 = vmul.f32 %v725, %v744
    %v747 = vadd.f32 %v712, %v296
    %v748 = vxor.u32 %v747, 2147483648
    %v749 = vmul.f32 %v748, 1.442695
    %v750 = vpow.pop %v749
    %v751 = vadd.f32 %v750, 1.0
    %v752 = vrcp.pop %v751
    %v753 = vmul.f32 1.0, %v752
    %v754 = vtanh.pop %v747
    %v755 = vmul.f32 %v753, %v655
    %757 = vrot.lane.b32.xlu0 %v754, 64
    %v758 = vpop.permute.xlu0 %757
    %v760 = vmul.f32 %v753, %v758
    %762 = vrot.lane.b32.xlu0 %v760, 32
    %v763 = vpop.permute.xlu0 %762
    %v765 = vadd.f32 %v755, %v763
    %v766 = vtanh.pop %v765
    %768 = vrot.lane.b32.xlu0 %v766, 64
    %v769 = vpop.permute.xlu0 %768
    %v771 = vmul.f32 %v753, %v769
    %v772 = vpack.c.bf16 %v771, %v771
    %v773 = vpack.c.bf16 %v746, %v746
    %775 = vrot.lane.b32.xlu0 %v773, 32
    %v776 = vpop.permute.xlu0 %775
    %v778 = vrot.slane %v772, 7
    %779 = vrot.lane.b32.xlu0 %v778, 64
    %v780 = vpop.permute.xlu0 %779
    %v783 = vsel %vm174, %v776, %v780
    %v785 = vrot.slane %v783, 1
    %v787 = vsel %vm90, %v785, 0
    %789 = vmatprep.subr.bf16.mxu0 0
    %790 = vmatpush1.bf16.msra.mxu0 0
    %791 = vmatprep.subr.bf16.mxu0 0
    %792 = vmatpush1.bf16.msra.mxu0 0
    %793 = vmatprep.subr.bf16.mxu0 0
    %794 = vmatpush1.bf16.msra.mxu0 0
    %795 = vmatprep.subr.bf16.mxu0 0
    %796 = vmatpush1.bf16.msra.mxu0 0
    %797 = vmatprep.subr.bf16.mxu0 %v209
    %798 = vmatpush1.bf16.msra.mxu0 %v208
    %799 = vmatprep.subr.bf16.mxu0 %v207
    %800 = vmatpush1.bf16.msra.mxu0 %v206
    %801 = vmatprep.subr.bf16.mxu0 %v205
    %802 = vmatpush1.bf16.msra.mxu0 %v204
    %803 = vmatprep.subr.bf16.mxu0 %v203
    %804 = vmatpush1.bf16.msra.mxu0 %v202
    %805 = vmatprep.subr.bf16.mxu0 0
    %806 = vmatpush2.bf16.msra.mxu0 0
    %807 = vmatprep.subr.bf16.mxu0 0
    %808 = vmatpush2.bf16.msra.mxu0 0
    %809 = vmatprep.subr.bf16.mxu0 0
    %810 = vmatpush2.bf16.msra.mxu0 0
    %811 = vmatprep.subr.bf16.mxu0 0
    %812 = vmatpush2.bf16.msra.mxu0 0
    %813 = vmatprep.subr.bf16.mxu0 0
    %814 = vmatpush2.bf16.msra.mxu0 0
    %815 = vmatprep.subr.bf16.mxu0 0
    %816 = vmatpush2.bf16.msra.mxu0 0
    %817 = vmatprep.subr.bf16.mxu0 0
    %818 = vmatpush2.bf16.msra.mxu0 0
    %819 = vmatprep.subr.bf16.mxu0 0
    %820 = vmatpush2.bf16.msra.mxu0 0
    %821 = vmatprep.mubr.bf16.mxu0 0
    %822 = vmatmul.mubr.bf16.gmra.mxu0 %v787
    %v823 = vpop.f32.mrf.mxu0
    %v824 = vadd.f32 0.0, %v823
    %v825 = vpop.f32.mrf.mxu0
    %v826 = vadd.f32 0.0, %v825
    %v827 = vpop.f32.mrf.mxu0
    %v828 = vpop.f32.mrf.mxu0
    %829 = vdwg.mxu0
    %v831 = vrot.slane %v824, 4
    %v833 = vadd.f32 %v135, %v831
    %v834 = vxor.u32 %v833, 2147483648
    %v835 = vmul.f32 %v834, 1.442695
    %v836 = vpow.pop %v835
    %v837 = vadd.f32 %v836, 1.0
    %v838 = vrcp.pop %v837
    %v839 = vmul.f32 1.0, %v838
    %v840 = vtanh.pop %v833
    %v842 = vrot.slane %v740, 6
    %v844 = vmul.f32 %v839, %v842
    %846 = vrot.lane.b32.xlu0 %v840, 64
    %v847 = vpop.permute.xlu0 %846
    %v849 = vmul.f32 %v839, %v847
    %851 = vrot.lane.b32.xlu0 %v849, 32
    %v852 = vpop.permute.xlu0 %851
    %v854 = vadd.f32 %v844, %v852
    %v855 = vtanh.pop %v854
    %857 = vrot.lane.b32.xlu0 %v855, 64
    %v858 = vpop.permute.xlu0 %857
    %v860 = vmul.f32 %v839, %v858
    %v861 = vadd.f32 %v826, %v296
    %v862 = vxor.u32 %v861, 2147483648
    %v863 = vmul.f32 %v862, 1.442695
    %v864 = vpow.pop %v863
    %v865 = vadd.f32 %v864, 1.0
    %v866 = vrcp.pop %v865
    %v867 = vmul.f32 1.0, %v866
    %v868 = vtanh.pop %v861
    %v869 = vmul.f32 %v867, %v765
    %871 = vrot.lane.b32.xlu0 %v868, 64
    %v872 = vpop.permute.xlu0 %871
    %v874 = vmul.f32 %v867, %v872
    %876 = vrot.lane.b32.xlu0 %v874, 32
    %v877 = vpop.permute.xlu0 %876
    %v879 = vadd.f32 %v869, %v877
    %v880 = vtanh.pop %v879
    %882 = vrot.lane.b32.xlu0 %v880, 64
    %v883 = vpop.permute.xlu0 %882
    %v885 = vmul.f32 %v867, %v883
    %v886 = vpack.c.bf16 %v885, %v885
    %v887 = vpack.c.bf16 %v860, %v860
    %889 = vrot.lane.b32.xlu0 %v887, 32
    %v890 = vpop.permute.xlu0 %889
    %v892 = vrot.slane %v886, 6
    %893 = vrot.lane.b32.xlu0 %v892, 64
    %v894 = vpop.permute.xlu0 %893
    %v897 = vsel %vm174, %v890, %v894
    %v899 = vrot.slane %v897, 2
    %v901 = vsel %vm90, %v899, 0
    %903 = vmatprep.subr.bf16.mxu0 0
    %904 = vmatpush1.bf16.msra.mxu0 0
    %905 = vmatprep.subr.bf16.mxu0 0
    %906 = vmatpush1.bf16.msra.mxu0 0
    %907 = vmatprep.subr.bf16.mxu0 0
    %908 = vmatpush1.bf16.msra.mxu0 0
    %909 = vmatprep.subr.bf16.mxu0 0
    %910 = vmatpush1.bf16.msra.mxu0 0
    %911 = vmatprep.subr.bf16.mxu0 %v209
    %912 = vmatpush1.bf16.msra.mxu0 %v208
    %913 = vmatprep.subr.bf16.mxu0 %v207
    %914 = vmatpush1.bf16.msra.mxu0 %v206
    %915 = vmatprep.subr.bf16.mxu0 %v205
    %916 = vmatpush1.bf16.msra.mxu0 %v204
    %917 = vmatprep.subr.bf16.mxu0 %v203
    %918 = vmatpush1.bf16.msra.mxu0 %v202
    %919 = vmatprep.subr.bf16.mxu0 0
    %920 = vmatpush2.bf16.msra.mxu0 0
    %921 = vmatprep.subr.bf16.mxu0 0
    %922 = vmatpush2.bf16.msra.mxu0 0
    %923 = vmatprep.subr.bf16.mxu0 0
    %924 = vmatpush2.bf16.msra.mxu0 0
    %925 = vmatprep.subr.bf16.mxu0 0
    %926 = vmatpush2.bf16.msra.mxu0 0
    %927 = vmatprep.subr.bf16.mxu0 0
    %928 = vmatpush2.bf16.msra.mxu0 0
    %929 = vmatprep.subr.bf16.mxu0 0
    %930 = vmatpush2.bf16.msra.mxu0 0
    %931 = vmatprep.subr.bf16.mxu0 0
    %932 = vmatpush2.bf16.msra.mxu0 0
    %933 = vmatprep.subr.bf16.mxu0 0
    %934 = vmatpush2.bf16.msra.mxu0 0
    %935 = vmatprep.mubr.bf16.mxu0 0
    %936 = vmatmul.mubr.bf16.gmra.mxu0 %v901
    %v937 = vpop.f32.mrf.mxu0
    %v938 = vadd.f32 0.0, %v937
    %v939 = vpop.f32.mrf.mxu0
    %v940 = vadd.f32 0.0, %v939
    %v941 = vpop.f32.mrf.mxu0
    %v942 = vpop.f32.mrf.mxu0
    %943 = vdwg.mxu0
    %v945 = vrot.slane %v938, 2
    %v947 = vadd.f32 %v135, %v945
    %v948 = vxor.u32 %v947, 2147483648
    %v949 = vmul.f32 %v948, 1.442695
    %v950 = vpow.pop %v949
    %v951 = vadd.f32 %v950, 1.0
    %v952 = vrcp.pop %v951
    %v953 = vmul.f32 1.0, %v952
    %v954 = vtanh.pop %v947
    %v956 = vrot.slane %v854, 6
    %v958 = vmul.f32 %v953, %v956
    %960 = vrot.lane.b32.xlu0 %v954, 64
    %v961 = vpop.permute.xlu0 %960
    %v963 = vmul.f32 %v953, %v961
    %965 = vrot.lane.b32.xlu0 %v963, 32
    %v966 = vpop.permute.xlu0 %965
    %v968 = vadd.f32 %v958, %v966
    %v969 = vtanh.pop %v968
    %971 = vrot.lane.b32.xlu0 %v969, 64
    %v972 = vpop.permute.xlu0 %971
    %v974 = vmul.f32 %v953, %v972
    %v975 = vadd.f32 %v940, %v296
    %v976 = vxor.u32 %v975, 2147483648
    %v977 = vmul.f32 %v976, 1.442695
    %v978 = vpow.pop %v977
    %v979 = vadd.f32 %v978, 1.0
    %v980 = vrcp.pop %v979
    %v981 = vmul.f32 1.0, %v980
    %v982 = vtanh.pop %v975
    %v983 = vmul.f32 %v981, %v879
    %985 = vrot.lane.b32.xlu0 %v982, 64
    %v986 = vpop.permute.xlu0 %985
    %v988 = vmul.f32 %v981, %v986
    %990 = vrot.lane.b32.xlu0 %v988, 32
    %v991 = vpop.permute.xlu0 %990
    %v993 = vadd.f32 %v983, %v991
    %v994 = vtanh.pop %v993
    %996 = vrot.lane.b32.xlu0 %v994, 64
    %v997 = vpop.permute.xlu0 %996
    %v999 = vmul.f32 %v981, %v997
    %v1000 = vpack.c.bf16 %v999, %v999
    %v1001 = vpack.c.bf16 %v974, %v974
    %1003 = vrot.lane.b32.xlu0 %v1001, 32
    %v1004 = vpop.permute.xlu0 %1003
    %v1006 = vrot.slane %v1000, 5
    %1007 = vrot.lane.b32.xlu0 %v1006, 64
    %v1008 = vpop.permute.xlu0 %1007
    %v1011 = vsel %vm174, %v1004, %v1008
    %v1013 = vrot.slane %v1011, 3
    %v1015 = vsel %vm90, %v1013, 0
    %1017 = vmatprep.subr.bf16.mxu0 0
    %1018 = vmatpush1.bf16.msra.mxu0 0
    %1019 = vmatprep.subr.bf16.mxu0 0
    %1020 = vmatpush1.bf16.msra.mxu0 0
    %1021 = vmatprep.subr.bf16.mxu0 0
    %1022 = vmatpush1.bf16.msra.mxu0 0
    %1023 = vmatprep.subr.bf16.mxu0 0
    %1024 = vmatpush1.bf16.msra.mxu0 0
    %1025 = vmatprep.subr.bf16.mxu0 %v209
    %1026 = vmatpush1.bf16.msra.mxu0 %v208
    %1027 = vmatprep.subr.bf16.mxu0 %v207
    %1028 = vmatpush1.bf16.msra.mxu0 %v206
    %1029 = vmatprep.subr.bf16.mxu0 %v205
    %1030 = vmatpush1.bf16.msra.mxu0 %v204
    %1031 = vmatprep.subr.bf16.mxu0 %v203
    %1032 = vmatpush1.bf16.msra.mxu0 %v202
    %1033 = vmatprep.subr.bf16.mxu0 0
    %1034 = vmatpush2.bf16.msra.mxu0 0
    %1035 = vmatprep.subr.bf16.mxu0 0
    %1036 = vmatpush2.bf16.msra.mxu0 0
    %1037 = vmatprep.subr.bf16.mxu0 0
    %1038 = vmatpush2.bf16.msra.mxu0 0
    %1039 = vmatprep.subr.bf16.mxu0 0
    %1040 = vmatpush2.bf16.msra.mxu0 0
    %1041 = vmatprep.subr.bf16.mxu0 0
    %1042 = vmatpush2.bf16.msra.mxu0 0
    %1043 = vmatprep.subr.bf16.mxu0 0
    %1044 = vmatpush2.bf16.msra.mxu0 0
    %1045 = vmatprep.subr.bf16.mxu0 0
    %1046 = vmatpush2.bf16.msra.mxu0 0
    %1047 = vmatprep.subr.bf16.mxu0 0
    %1048 = vmatpush2.bf16.msra.mxu0 0
    %1049 = vmatprep.mubr.bf16.mxu0 0
    %1050 = vmatmul.mubr.bf16.gmra.mxu0 %v1015
    %v1051 = vpop.f32.mrf.mxu0
    %v1052 = vadd.f32 0.0, %v1051
    %v1053 = vpop.f32.mrf.mxu0
    %v1054 = vadd.f32 0.0, %v1053
    %v1055 = vpop.f32.mrf.mxu0
    %v1056 = vpop.f32.mrf.mxu0
    %1057 = vdwg.mxu0
    %v1058 = vadd.f32 %v140, %v1052
    %v1059 = vxor.u32 %v1058, 2147483648
    %v1060 = vmul.f32 %v1059, 1.442695
    %v1061 = vpow.pop %v1060
    %v1062 = vadd.f32 %v1061, 1.0
    %v1063 = vrcp.pop %v1062
    %v1064 = vmul.f32 1.0, %v1063
    %v1065 = vtanh.pop %v1058
    %v1067 = vrot.slane %v968, 6
    %v1069 = vmul.f32 %v1064, %v1067
    %1071 = vrot.lane.b32.xlu0 %v1065, 64
    %v1072 = vpop.permute.xlu0 %1071
    %v1074 = vmul.f32 %v1064, %v1072
    %1076 = vrot.lane.b32.xlu0 %v1074, 32
    %v1077 = vpop.permute.xlu0 %1076
    %v1079 = vadd.f32 %v1069, %v1077
    %v1080 = vtanh.pop %v1079
    %1082 = vrot.lane.b32.xlu0 %v1080, 64
    %v1083 = vpop.permute.xlu0 %1082
    %v1085 = vmul.f32 %v1064, %v1083
    %v1086 = vadd.f32 %v1054, %v296
    %v1087 = vxor.u32 %v1086, 2147483648
    %v1088 = vmul.f32 %v1087, 1.442695
    %v1089 = vpow.pop %v1088
    %v1090 = vadd.f32 %v1089, 1.0
    %v1091 = vrcp.pop %v1090
    %v1092 = vmul.f32 1.0, %v1091
    %v1093 = vtanh.pop %v1086
    %v1094 = vmul.f32 %v1092, %v993
    %1096 = vrot.lane.b32.xlu0 %v1093, 64
    %v1097 = vpop.permute.xlu0 %1096
    %v1099 = vmul.f32 %v1092, %v1097
    %1101 = vrot.lane.b32.xlu0 %v1099, 32
    %v1102 = vpop.permute.xlu0 %1101
    %v1104 = vadd.f32 %v1094, %v1102
    %v1105 = vtanh.pop %v1104
    %1107 = vrot.lane.b32.xlu0 %v1105, 64
    %v1108 = vpop.permute.xlu0 %1107
    %v1110 = vmul.f32 %v1092, %v1108
    %v1111 = vpack.c.bf16 %v1110, %v1110
    %v1112 = vpack.c.bf16 %v1085, %v1085
    %1114 = vrot.lane.b32.xlu0 %v1112, 32
    %v1115 = vpop.permute.xlu0 %1114
    %1117 = vrot.lane.b32.xlu0 %v1111, 64
    %v1118 = vpop.permute.xlu0 %1117
    %v1121 = vsel %vm174, %v1115, %v1118
    %v1122 = vsel %vm90, %v1121, 0
    %1124 = vmatprep.subr.bf16.mxu0 0
    %1125 = vmatpush1.bf16.msra.mxu0 0
    %1126 = vmatprep.subr.bf16.mxu0 0
    %1127 = vmatpush1.bf16.msra.mxu0 0
    %1128 = vmatprep.subr.bf16.mxu0 0
    %1129 = vmatpush1.bf16.msra.mxu0 0
    %1130 = vmatprep.subr.bf16.mxu0 0
    %1131 = vmatpush1.bf16.msra.mxu0 0
    %1132 = vmatprep.subr.bf16.mxu0 %v209
    %1133 = vmatpush1.bf16.msra.mxu0 %v208
    %1134 = vmatprep.subr.bf16.mxu0 %v207
    %1135 = vmatpush1.bf16.msra.mxu0 %v206
    %1136 = vmatprep.subr.bf16.mxu0 %v205
    %1137 = vmatpush1.bf16.msra.mxu0 %v204
    %1138 = vmatprep.subr.bf16.mxu0 %v203
    %1139 = vmatpush1.bf16.msra.mxu0 %v202
    %1140 = vmatprep.subr.bf16.mxu0 0
    %1141 = vmatpush2.bf16.msra.mxu0 0
    %1142 = vmatprep.subr.bf16.mxu0 0
    %1143 = vmatpush2.bf16.msra.mxu0 0
    %1144 = vmatprep.subr.bf16.mxu0 0
    %1145 = vmatpush2.bf16.msra.mxu0 0
    %1146 = vmatprep.subr.bf16.mxu0 0
    %1147 = vmatpush2.bf16.msra.mxu0 0
    %1148 = vmatprep.subr.bf16.mxu0 0
    %1149 = vmatpush2.bf16.msra.mxu0 0
    %1150 = vmatprep.subr.bf16.mxu0 0
    %1151 = vmatpush2.bf16.msra.mxu0 0
    %1152 = vmatprep.subr.bf16.mxu0 0
    %1153 = vmatpush2.bf16.msra.mxu0 0
    %1154 = vmatprep.subr.bf16.mxu0 0
    %1155 = vmatpush2.bf16.msra.mxu0 0
    %1156 = vmatprep.mubr.bf16.mxu0 0
    %1157 = vmatmul.mubr.bf16.gmra.mxu0 %v1122
    %v1158 = vpop.f32.mrf.mxu0
    %v1159 = vadd.f32 0.0, %v1158
    %v1160 = vpop.f32.mrf.mxu0
    %v1161 = vadd.f32 0.0, %v1160
    %v1162 = vpop.f32.mrf.mxu0
    %v1163 = vpop.f32.mrf.mxu0
    %1164 = vdwg.mxu0
    %v1166 = vrot.slane %v1159, 6
    %v1168 = vadd.f32 %v140, %v1166
    %v1169 = vxor.u32 %v1168, 2147483648
    %v1170 = vmul.f32 %v1169, 1.442695
    %v1171 = vpow.pop %v1170
    %v1172 = vadd.f32 %v1171, 1.0
    %v1173 = vrcp.pop %v1172
    %v1174 = vmul.f32 1.0, %v1173
    %v1175 = vtanh.pop %v1168
    %v1177 = vrot.slane %v1079, 6
    %v1179 = vmul.f32 %v1174, %v1177
    %1181 = vrot.lane.b32.xlu0 %v1175, 64
    %v1182 = vpop.permute.xlu0 %1181
    %v1184 = vmul.f32 %v1174, %v1182
    %1186 = vrot.lane.b32.xlu0 %v1184, 32
    %v1187 = vpop.permute.xlu0 %1186
    %v1189 = vadd.f32 %v1179, %v1187
    %v1190 = vtanh.pop %v1189
    %1192 = vrot.lane.b32.xlu0 %v1190, 64
    %v1193 = vpop.permute.xlu0 %1192
    %v1195 = vmul.f32 %v1174, %v1193
    %v1196 = vadd.f32 %v1161, %v296
    %v1197 = vxor.u32 %v1196, 2147483648
    %v1198 = vmul.f32 %v1197, 1.442695
    %v1199 = vpow.pop %v1198
    %v1200 = vadd.f32 %v1199, 1.0
    %v1201 = vrcp.pop %v1200
    %v1202 = vmul.f32 1.0, %v1201
    %v1203 = vtanh.pop %v1196
    %v1204 = vmul.f32 %v1202, %v1104
    %1206 = vrot.lane.b32.xlu0 %v1203, 64
    %v1207 = vpop.permute.xlu0 %1206
    %v1209 = vmul.f32 %v1202, %v1207
    %1211 = vrot.lane.b32.xlu0 %v1209, 32
    %v1212 = vpop.permute.xlu0 %1211
    %v1214 = vadd.f32 %v1204, %v1212
    %v1215 = vtanh.pop %v1214
    %1217 = vrot.lane.b32.xlu0 %v1215, 64
    %v1218 = vpop.permute.xlu0 %1217
    %v1220 = vmul.f32 %v1202, %v1218
    %v1221 = vpack.c.bf16 %v1220, %v1220
    %v1222 = vpack.c.bf16 %v1195, %v1195
    %1224 = vrot.lane.b32.xlu0 %v1222, 32
    %v1225 = vpop.permute.xlu0 %1224
    %v1227 = vrot.slane %v1221, 7
    %1228 = vrot.lane.b32.xlu0 %v1227, 64
    %v1229 = vpop.permute.xlu0 %1228
    %v1232 = vsel %vm174, %v1225, %v1229
    %v1234 = vrot.slane %v1232, 1
    %v1236 = vsel %vm90, %v1234, 0
    %1238 = vmatprep.subr.bf16.mxu0 0
    %1239 = vmatpush1.bf16.msra.mxu0 0
    %1240 = vmatprep.subr.bf16.mxu0 0
    %1241 = vmatpush1.bf16.msra.mxu0 0
    %1242 = vmatprep.subr.bf16.mxu0 0
    %1243 = vmatpush1.bf16.msra.mxu0 0
    %1244 = vmatprep.subr.bf16.mxu0 0
    %1245 = vmatpush1.bf16.msra.mxu0 0
    %1246 = vmatprep.subr.bf16.mxu0 %v209
    %1247 = vmatpush1.bf16.msra.mxu0 %v208
    %1248 = vmatprep.subr.bf16.mxu0 %v207
    %1249 = vmatpush1.bf16.msra.mxu0 %v206
    %1250 = vmatprep.subr.bf16.mxu0 %v205
    %1251 = vmatpush1.bf16.msra.mxu0 %v204
    %1252 = vmatprep.subr.bf16.mxu0 %v203
    %1253 = vmatpush1.bf16.msra.mxu0 %v202
    %1254 = vmatprep.subr.bf16.mxu0 0
    %1255 = vmatpush2.bf16.msra.mxu0 0
    %1256 = vmatprep.subr.bf16.mxu0 0
    %1257 = vmatpush2.bf16.msra.mxu0 0
    %1258 = vmatprep.subr.bf16.mxu0 0
    %1259 = vmatpush2.bf16.msra.mxu0 0
    %1260 = vmatprep.subr.bf16.mxu0 0
    %1261 = vmatpush2.bf16.msra.mxu0 0
    %1262 = vmatprep.subr.bf16.mxu0 0
    %1263 = vmatpush2.bf16.msra.mxu0 0
    %1264 = vmatprep.subr.bf16.mxu0 0
    %1265 = vmatpush2.bf16.msra.mxu0 0
    %1266 = vmatprep.subr.bf16.mxu0 0
    %1267 = vmatpush2.bf16.msra.mxu0 0
    %1268 = vmatprep.subr.bf16.mxu0 0
    %1269 = vmatpush2.bf16.msra.mxu0 0
    %1270 = vmatprep.mubr.bf16.mxu0 0
    %1271 = vmatmul.mubr.bf16.gmra.mxu0 %v1236
    %v1272 = vpop.f32.mrf.mxu0
    %v1273 = vadd.f32 0.0, %v1272
    %v1274 = vpop.f32.mrf.mxu0
    %v1275 = vadd.f32 0.0, %v1274
    %v1276 = vpop.f32.mrf.mxu0
    %v1277 = vpop.f32.mrf.mxu0
    %1278 = vdwg.mxu0
    %v1280 = vrot.slane %v1273, 4
    %v1282 = vadd.f32 %v140, %v1280
    %v1283 = vxor.u32 %v1282, 2147483648
    %v1284 = vmul.f32 %v1283, 1.442695
    %v1285 = vpow.pop %v1284
    %v1286 = vadd.f32 %v1285, 1.0
    %v1287 = vrcp.pop %v1286
    %v1288 = vmul.f32 1.0, %v1287
    %v1289 = vtanh.pop %v1282
    %v1291 = vrot.slane %v1189, 6
    %v1293 = vmul.f32 %v1288, %v1291
    %1295 = vrot.lane.b32.xlu0 %v1289, 64
    %v1296 = vpop.permute.xlu0 %1295
    %v1298 = vmul.f32 %v1288, %v1296
    %1300 = vrot.lane.b32.xlu0 %v1298, 32
    %v1301 = vpop.permute.xlu0 %1300
    %v1303 = vadd.f32 %v1293, %v1301
    %v1304 = vtanh.pop %v1303
    %1306 = vrot.lane.b32.xlu0 %v1304, 64
    %v1307 = vpop.permute.xlu0 %1306
    %v1309 = vmul.f32 %v1288, %v1307
    %v1310 = vadd.f32 %v1275, %v296
    %v1311 = vxor.u32 %v1310, 2147483648
    %v1312 = vmul.f32 %v1311, 1.442695
    %v1313 = vpow.pop %v1312
    %v1314 = vadd.f32 %v1313, 1.0
    %v1315 = vrcp.pop %v1314
    %v1316 = vmul.f32 1.0, %v1315
    %v1317 = vtanh.pop %v1310
    %v1318 = vmul.f32 %v1316, %v1214
    %1320 = vrot.lane.b32.xlu0 %v1317, 64
    %v1321 = vpop.permute.xlu0 %1320
    %v1323 = vmul.f32 %v1316, %v1321
    %1325 = vrot.lane.b32.xlu0 %v1323, 32
    %v1326 = vpop.permute.xlu0 %1325
    %v1328 = vadd.f32 %v1318, %v1326
    %v1329 = vtanh.pop %v1328
    %1331 = vrot.lane.b32.xlu0 %v1329, 64
    %v1332 = vpop.permute.xlu0 %1331
    %v1334 = vmul.f32 %v1316, %v1332
    %v1335 = vpack.c.bf16 %v1334, %v1334
    %v1336 = vpack.c.bf16 %v1309, %v1309
    %1338 = vrot.lane.b32.xlu0 %v1336, 32
    %v1339 = vpop.permute.xlu0 %1338
    %v1341 = vrot.slane %v1335, 6
    %1342 = vrot.lane.b32.xlu0 %v1341, 64
    %v1343 = vpop.permute.xlu0 %1342
    %v1346 = vsel %vm174, %v1339, %v1343
    %v1348 = vrot.slane %v1346, 2
    %v1350 = vsel %vm90, %v1348, 0
    %1352 = vmatprep.subr.bf16.mxu0 0
    %1353 = vmatpush1.bf16.msra.mxu0 0
    %1354 = vmatprep.subr.bf16.mxu0 0
    %1355 = vmatpush1.bf16.msra.mxu0 0
    %1356 = vmatprep.subr.bf16.mxu0 0
    %1357 = vmatpush1.bf16.msra.mxu0 0
    %1358 = vmatprep.subr.bf16.mxu0 0
    %1359 = vmatpush1.bf16.msra.mxu0 0
    %1360 = vmatprep.subr.bf16.mxu0 %v209
    %1361 = vmatpush1.bf16.msra.mxu0 %v208
    %1362 = vmatprep.subr.bf16.mxu0 %v207
    %1363 = vmatpush1.bf16.msra.mxu0 %v206
    %1364 = vmatprep.subr.bf16.mxu0 %v205
    %1365 = vmatpush1.bf16.msra.mxu0 %v204
    %1366 = vmatprep.subr.bf16.mxu0 %v203
    %1367 = vmatpush1.bf16.msra.mxu0 %v202
    %1368 = vmatprep.subr.bf16.mxu0 0
    %1369 = vmatpush2.bf16.msra.mxu0 0
    %1370 = vmatprep.subr.bf16.mxu0 0
    %1371 = vmatpush2.bf16.msra.mxu0 0
    %1372 = vmatprep.subr.bf16.mxu0 0
    %1373 = vmatpush2.bf16.msra.mxu0 0
    %1374 = vmatprep.subr.bf16.mxu0 0
    %1375 = vmatpush2.bf16.msra.mxu0 0
    %1376 = vmatprep.subr.bf16.mxu0 0
    %1377 = vmatpush2.bf16.msra.mxu0 0
    %1378 = vmatprep.subr.bf16.mxu0 0
    %1379 = vmatpush2.bf16.msra.mxu0 0
    %1380 = vmatprep.subr.bf16.mxu0 0
    %1381 = vmatpush2.bf16.msra.mxu0 0
    %1382 = vmatprep.subr.bf16.mxu0 0
    %1383 = vmatpush2.bf16.msra.mxu0 0
    %1384 = vmatprep.mubr.bf16.mxu0 0
    %1385 = vmatmul.mubr.bf16.gmra.mxu0 %v1350
    %v1386 = vpop.f32.mrf.mxu0
    %v1387 = vadd.f32 0.0, %v1386
    %v1388 = vpop.f32.mrf.mxu0
    %v1389 = vadd.f32 0.0, %v1388
    %v1390 = vpop.f32.mrf.mxu0
    %v1391 = vpop.f32.mrf.mxu0
    %1392 = vdwg.mxu0
    %v1394 = vrot.slane %v1387, 2
    %v1396 = vadd.f32 %v140, %v1394
    %v1397 = vxor.u32 %v1396, 2147483648
    %v1398 = vmul.f32 %v1397, 1.442695
    %v1399 = vpow.pop %v1398
    %v1400 = vadd.f32 %v1399, 1.0
    %v1401 = vrcp.pop %v1400
    %v1402 = vmul.f32 1.0, %v1401
    %v1403 = vtanh.pop %v1396
    %v1405 = vrot.slane %v1303, 6
    %v1407 = vmul.f32 %v1402, %v1405
    %1409 = vrot.lane.b32.xlu0 %v1403, 64
    %v1410 = vpop.permute.xlu0 %1409
    %v1412 = vmul.f32 %v1402, %v1410
    %1414 = vrot.lane.b32.xlu0 %v1412, 32
    %v1415 = vpop.permute.xlu0 %1414
    %v1417 = vadd.f32 %v1407, %v1415
    %v1418 = vtanh.pop %v1417
    %1420 = vrot.lane.b32.xlu0 %v1418, 64
    %v1421 = vpop.permute.xlu0 %1420
    %v1423 = vmul.f32 %v1402, %v1421
    %v1424 = vadd.f32 %v1389, %v296
    %v1425 = vxor.u32 %v1424, 2147483648
    %v1426 = vmul.f32 %v1425, 1.442695
    %v1427 = vpow.pop %v1426
    %v1428 = vadd.f32 %v1427, 1.0
    %v1429 = vrcp.pop %v1428
    %v1430 = vmul.f32 1.0, %v1429
    %v1431 = vtanh.pop %v1424
    %v1432 = vmul.f32 %v1430, %v1328
    %1434 = vrot.lane.b32.xlu0 %v1431, 64
    %v1435 = vpop.permute.xlu0 %1434
    %v1437 = vmul.f32 %v1430, %v1435
    %1439 = vrot.lane.b32.xlu0 %v1437, 32
    %v1440 = vpop.permute.xlu0 %1439
    %v1442 = vadd.f32 %v1432, %v1440
    %v1443 = vtanh.pop %v1442
    %1445 = vrot.lane.b32.xlu0 %v1443, 64
    %v1446 = vpop.permute.xlu0 %1445
    %v1448 = vmul.f32 %v1430, %v1446
    %v1449 = vpack.c.bf16 %v1448, %v1448
    %v1450 = vpack.c.bf16 %v1423, %v1423
    %1452 = vrot.lane.b32.xlu0 %v1450, 32
    %v1453 = vpop.permute.xlu0 %1452
    %v1455 = vrot.slane %v1449, 5
    %1456 = vrot.lane.b32.xlu0 %v1455, 64
    %v1457 = vpop.permute.xlu0 %1456
    %v1460 = vsel %vm174, %v1453, %v1457
    %v1462 = vrot.slane %v1460, 3
    %v1464 = vsel %vm90, %v1462, 0
    %1466 = vmatprep.subr.bf16.mxu0 0
    %1467 = vmatpush1.bf16.msra.mxu0 0
    %1468 = vmatprep.subr.bf16.mxu0 0
    %1469 = vmatpush1.bf16.msra.mxu0 0
    %1470 = vmatprep.subr.bf16.mxu0 0
    %1471 = vmatpush1.bf16.msra.mxu0 0
    %1472 = vmatprep.subr.bf16.mxu0 0
    %1473 = vmatpush1.bf16.msra.mxu0 0
    %1474 = vmatprep.subr.bf16.mxu0 %v209
    %1475 = vmatpush1.bf16.msra.mxu0 %v208
    %1476 = vmatprep.subr.bf16.mxu0 %v207
    %1477 = vmatpush1.bf16.msra.mxu0 %v206
    %1478 = vmatprep.subr.bf16.mxu0 %v205
    %1479 = vmatpush1.bf16.msra.mxu0 %v204
    %1480 = vmatprep.subr.bf16.mxu0 %v203
    %1481 = vmatpush1.bf16.msra.mxu0 %v202
    %1482 = vmatprep.subr.bf16.mxu0 0
    %1483 = vmatpush2.bf16.msra.mxu0 0
    %1484 = vmatprep.subr.bf16.mxu0 0
    %1485 = vmatpush2.bf16.msra.mxu0 0
    %1486 = vmatprep.subr.bf16.mxu0 0
    %1487 = vmatpush2.bf16.msra.mxu0 0
    %1488 = vmatprep.subr.bf16.mxu0 0
    %1489 = vmatpush2.bf16.msra.mxu0 0
    %1490 = vmatprep.subr.bf16.mxu0 0
    %1491 = vmatpush2.bf16.msra.mxu0 0
    %1492 = vmatprep.subr.bf16.mxu0 0
    %1493 = vmatpush2.bf16.msra.mxu0 0
    %1494 = vmatprep.subr.bf16.mxu0 0
    %1495 = vmatpush2.bf16.msra.mxu0 0
    %1496 = vmatprep.subr.bf16.mxu0 0
    %1497 = vmatpush2.bf16.msra.mxu0 0
    %1498 = vmatprep.mubr.bf16.mxu0 0
    %1499 = vmatmul.mubr.bf16.gmra.mxu0 %v1464
    %v1500 = vpop.f32.mrf.mxu0
    %v1501 = vadd.f32 0.0, %v1500
    %v1502 = vpop.f32.mrf.mxu0
    %v1503 = vadd.f32 0.0, %v1502
    %v1504 = vpop.f32.mrf.mxu0
    %v1505 = vpop.f32.mrf.mxu0
    %1506 = vdwg.mxu0
    %v1507 = vadd.f32 %v143, %v1501
    %v1508 = vxor.u32 %v1507, 2147483648
    %v1509 = vmul.f32 %v1508, 1.442695
    %v1510 = vpow.pop %v1509
    %v1511 = vadd.f32 %v1510, 1.0
    %v1512 = vrcp.pop %v1511
    %v1513 = vmul.f32 1.0, %v1512
    %v1514 = vtanh.pop %v1507
    %v1516 = vrot.slane %v1417, 6
    %v1518 = vmul.f32 %v1513, %v1516
    %1520 = vrot.lane.b32.xlu0 %v1514, 64
    %v1521 = vpop.permute.xlu0 %1520
    %v1523 = vmul.f32 %v1513, %v1521
    %1525 = vrot.lane.b32.xlu0 %v1523, 32
    %v1526 = vpop.permute.xlu0 %1525
    %v1528 = vadd.f32 %v1518, %v1526
    %v1529 = vtanh.pop %v1528
    %1531 = vrot.lane.b32.xlu0 %v1529, 64
    %v1532 = vpop.permute.xlu0 %1531
    %v1534 = vmul.f32 %v1513, %v1532
    %v1535 = vadd.f32 %v1503, %v296
    %v1536 = vxor.u32 %v1535, 2147483648
    %v1537 = vmul.f32 %v1536, 1.442695
    %v1538 = vpow.pop %v1537
    %v1539 = vadd.f32 %v1538, 1.0
    %v1540 = vrcp.pop %v1539
    %v1541 = vmul.f32 1.0, %v1540
    %v1542 = vtanh.pop %v1535
    %v1543 = vmul.f32 %v1541, %v1442
    %1545 = vrot.lane.b32.xlu0 %v1542, 64
    %v1546 = vpop.permute.xlu0 %1545
    %v1548 = vmul.f32 %v1541, %v1546
    %1550 = vrot.lane.b32.xlu0 %v1548, 32
    %v1551 = vpop.permute.xlu0 %1550
    %v1553 = vadd.f32 %v1543, %v1551
    %v1554 = vtanh.pop %v1553
    %1556 = vrot.lane.b32.xlu0 %v1554, 64
    %v1557 = vpop.permute.xlu0 %1556
    %v1559 = vmul.f32 %v1541, %v1557
    %v1560 = vpack.c.bf16 %v1559, %v1559
    %v1561 = vpack.c.bf16 %v1534, %v1534
    %1563 = vrot.lane.b32.xlu0 %v1561, 32
    %v1564 = vpop.permute.xlu0 %1563
    %1566 = vrot.lane.b32.xlu0 %v1560, 64
    %v1567 = vpop.permute.xlu0 %1566
    %v1570 = vsel %vm174, %v1564, %v1567
    %v1571 = vsel %vm90, %v1570, 0
    %1573 = vmatprep.subr.bf16.mxu0 0
    %1574 = vmatpush1.bf16.msra.mxu0 0
    %1575 = vmatprep.subr.bf16.mxu0 0
    %1576 = vmatpush1.bf16.msra.mxu0 0
    %1577 = vmatprep.subr.bf16.mxu0 0
    %1578 = vmatpush1.bf16.msra.mxu0 0
    %1579 = vmatprep.subr.bf16.mxu0 0
    %1580 = vmatpush1.bf16.msra.mxu0 0
    %1581 = vmatprep.subr.bf16.mxu0 %v209
    %1582 = vmatpush1.bf16.msra.mxu0 %v208
    %1583 = vmatprep.subr.bf16.mxu0 %v207
    %1584 = vmatpush1.bf16.msra.mxu0 %v206
    %1585 = vmatprep.subr.bf16.mxu0 %v205
    %1586 = vmatpush1.bf16.msra.mxu0 %v204
    %1587 = vmatprep.subr.bf16.mxu0 %v203
    %1588 = vmatpush1.bf16.msra.mxu0 %v202
    %1589 = vmatprep.subr.bf16.mxu0 0
    %1590 = vmatpush2.bf16.msra.mxu0 0
    %1591 = vmatprep.subr.bf16.mxu0 0
    %1592 = vmatpush2.bf16.msra.mxu0 0
    %1593 = vmatprep.subr.bf16.mxu0 0
    %1594 = vmatpush2.bf16.msra.mxu0 0
    %1595 = vmatprep.subr.bf16.mxu0 0
    %1596 = vmatpush2.bf16.msra.mxu0 0
    %1597 = vmatprep.subr.bf16.mxu0 0
    %1598 = vmatpush2.bf16.msra.mxu0 0
    %1599 = vmatprep.subr.bf16.mxu0 0
    %1600 = vmatpush2.bf16.msra.mxu0 0
    %1601 = vmatprep.subr.bf16.mxu0 0
    %1602 = vmatpush2.bf16.msra.mxu0 0
    %1603 = vmatprep.subr.bf16.mxu0 0
    %1604 = vmatpush2.bf16.msra.mxu0 0
    %1605 = vmatprep.mubr.bf16.mxu0 0
    %1606 = vmatmul.mubr.bf16.gmra.mxu0 %v1571
    %v1607 = vpop.f32.mrf.mxu0
    %v1608 = vadd.f32 0.0, %v1607
    %v1609 = vpop.f32.mrf.mxu0
    %v1610 = vadd.f32 0.0, %v1609
    %v1611 = vpop.f32.mrf.mxu0
    %v1612 = vpop.f32.mrf.mxu0
    %1613 = vdwg.mxu0
    %v1615 = vrot.slane %v1608, 6
    %v1617 = vadd.f32 %v143, %v1615
    %v1618 = vxor.u32 %v1617, 2147483648
    %v1619 = vmul.f32 %v1618, 1.442695
    %v1620 = vpow.pop %v1619
    %v1621 = vadd.f32 %v1620, 1.0
    %v1622 = vrcp.pop %v1621
    %v1623 = vmul.f32 1.0, %v1622
    %v1624 = vtanh.pop %v1617
    %v1626 = vrot.slane %v1528, 6
    %v1628 = vmul.f32 %v1623, %v1626
    %1630 = vrot.lane.b32.xlu0 %v1624, 64
    %v1631 = vpop.permute.xlu0 %1630
    %v1633 = vmul.f32 %v1623, %v1631
    %1635 = vrot.lane.b32.xlu0 %v1633, 32
    %v1636 = vpop.permute.xlu0 %1635
    %v1638 = vadd.f32 %v1628, %v1636
    %v1639 = vtanh.pop %v1638
    %1641 = vrot.lane.b32.xlu0 %v1639, 64
    %v1642 = vpop.permute.xlu0 %1641
    %v1644 = vmul.f32 %v1623, %v1642
    %v1645 = vadd.f32 %v1610, %v296
    %v1646 = vxor.u32 %v1645, 2147483648
    %v1647 = vmul.f32 %v1646, 1.442695
    %v1648 = vpow.pop %v1647
    %v1649 = vadd.f32 %v1648, 1.0
    %v1650 = vrcp.pop %v1649
    %v1651 = vmul.f32 1.0, %v1650
    %v1652 = vtanh.pop %v1645
    %v1653 = vmul.f32 %v1651, %v1553
    %1655 = vrot.lane.b32.xlu0 %v1652, 64
    %v1656 = vpop.permute.xlu0 %1655
    %v1658 = vmul.f32 %v1651, %v1656
    %1660 = vrot.lane.b32.xlu0 %v1658, 32
    %v1661 = vpop.permute.xlu0 %1660
    %v1663 = vadd.f32 %v1653, %v1661
    %v1664 = vtanh.pop %v1663
    %1666 = vrot.lane.b32.xlu0 %v1664, 64
    %v1667 = vpop.permute.xlu0 %1666
    %v1669 = vmul.f32 %v1651, %v1667
    %v1670 = vpack.c.bf16 %v1669, %v1669
    %v1671 = vpack.c.bf16 %v1644, %v1644
    %1673 = vrot.lane.b32.xlu0 %v1671, 32
    %v1674 = vpop.permute.xlu0 %1673
    %v1676 = vrot.slane %v1670, 7
    %1677 = vrot.lane.b32.xlu0 %v1676, 64
    %v1678 = vpop.permute.xlu0 %1677
    %v1681 = vsel %vm174, %v1674, %v1678
    %v1683 = vrot.slane %v1681, 1
    %v1685 = vsel %vm90, %v1683, 0
    %1687 = vmatprep.subr.bf16.mxu0 0
    %1688 = vmatpush1.bf16.msra.mxu0 0
    %1689 = vmatprep.subr.bf16.mxu0 0
    %1690 = vmatpush1.bf16.msra.mxu0 0
    %1691 = vmatprep.subr.bf16.mxu0 0
    %1692 = vmatpush1.bf16.msra.mxu0 0
    %1693 = vmatprep.subr.bf16.mxu0 0
    %1694 = vmatpush1.bf16.msra.mxu0 0
    %1695 = vmatprep.subr.bf16.mxu0 %v209
    %1696 = vmatpush1.bf16.msra.mxu0 %v208
    %1697 = vmatprep.subr.bf16.mxu0 %v207
    %1698 = vmatpush1.bf16.msra.mxu0 %v206
    %1699 = vmatprep.subr.bf16.mxu0 %v205
    %1700 = vmatpush1.bf16.msra.mxu0 %v204
    %1701 = vmatprep.subr.bf16.mxu0 %v203
    %1702 = vmatpush1.bf16.msra.mxu0 %v202
    %1703 = vmatprep.subr.bf16.mxu0 0
    %1704 = vmatpush2.bf16.msra.mxu0 0
    %1705 = vmatprep.subr.bf16.mxu0 0
    %1706 = vmatpush2.bf16.msra.mxu0 0
    %1707 = vmatprep.subr.bf16.mxu0 0
    %1708 = vmatpush2.bf16.msra.mxu0 0
    %1709 = vmatprep.subr.bf16.mxu0 0
    %1710 = vmatpush2.bf16.msra.mxu0 0
    %1711 = vmatprep.subr.bf16.mxu0 0
    %1712 = vmatpush2.bf16.msra.mxu0 0
    %1713 = vmatprep.subr.bf16.mxu0 0
    %1714 = vmatpush2.bf16.msra.mxu0 0
    %1715 = vmatprep.subr.bf16.mxu0 0
    %1716 = vmatpush2.bf16.msra.mxu0 0
    %1717 = vmatprep.subr.bf16.mxu0 0
    %1718 = vmatpush2.bf16.msra.mxu0 0
    %1719 = vmatprep.mubr.bf16.mxu0 0
    %1720 = vmatmul.mubr.bf16.gmra.mxu0 %v1685
    %v1721 = vpop.f32.mrf.mxu0
    %v1722 = vadd.f32 0.0, %v1721
    %v1723 = vpop.f32.mrf.mxu0
    %v1724 = vadd.f32 0.0, %v1723
    %v1725 = vpop.f32.mrf.mxu0
    %v1726 = vpop.f32.mrf.mxu0
    %1727 = vdwg.mxu0
    %v1729 = vrot.slane %v1722, 4
    %v1731 = vadd.f32 %v143, %v1729
    %v1732 = vxor.u32 %v1731, 2147483648
    %v1733 = vmul.f32 %v1732, 1.442695
    %v1734 = vpow.pop %v1733
    %v1735 = vadd.f32 %v1734, 1.0
    %v1736 = vrcp.pop %v1735
    %v1737 = vmul.f32 1.0, %v1736
    %v1738 = vtanh.pop %v1731
    %v1740 = vrot.slane %v1638, 6
    %v1742 = vmul.f32 %v1737, %v1740
    %1744 = vrot.lane.b32.xlu0 %v1738, 64
    %v1745 = vpop.permute.xlu0 %1744
    %v1747 = vmul.f32 %v1737, %v1745
    %1749 = vrot.lane.b32.xlu0 %v1747, 32
    %v1750 = vpop.permute.xlu0 %1749
    %v1752 = vadd.f32 %v1742, %v1750
    %v1753 = vtanh.pop %v1752
    %1755 = vrot.lane.b32.xlu0 %v1753, 64
    %v1756 = vpop.permute.xlu0 %1755
    %v1758 = vmul.f32 %v1737, %v1756
    %v1759 = vadd.f32 %v1724, %v296
    %v1760 = vxor.u32 %v1759, 2147483648
    %v1761 = vmul.f32 %v1760, 1.442695
    %v1762 = vpow.pop %v1761
    %v1763 = vadd.f32 %v1762, 1.0
    %v1764 = vrcp.pop %v1763
    %v1765 = vmul.f32 1.0, %v1764
    %v1766 = vtanh.pop %v1759
    %v1767 = vmul.f32 %v1765, %v1663
    %1769 = vrot.lane.b32.xlu0 %v1766, 64
    %v1770 = vpop.permute.xlu0 %1769
    %v1772 = vmul.f32 %v1765, %v1770
    %1774 = vrot.lane.b32.xlu0 %v1772, 32
    %v1775 = vpop.permute.xlu0 %1774
    %v1777 = vadd.f32 %v1767, %v1775
    %v1778 = vtanh.pop %v1777
    %1780 = vrot.lane.b32.xlu0 %v1778, 64
    %v1781 = vpop.permute.xlu0 %1780
    %v1783 = vmul.f32 %v1765, %v1781
    %v1784 = vpack.c.bf16 %v1783, %v1783
    %v1785 = vpack.c.bf16 %v1758, %v1758
    %1787 = vrot.lane.b32.xlu0 %v1785, 32
    %v1788 = vpop.permute.xlu0 %1787
    %v1790 = vrot.slane %v1784, 6
    %1791 = vrot.lane.b32.xlu0 %v1790, 64
    %v1792 = vpop.permute.xlu0 %1791
    %v1795 = vsel %vm174, %v1788, %v1792
    %v1797 = vrot.slane %v1795, 2
    %v1799 = vsel %vm90, %v1797, 0
    %1801 = vmatprep.subr.bf16.mxu0 0
    %1802 = vmatpush1.bf16.msra.mxu0 0
    %1803 = vmatprep.subr.bf16.mxu0 0
    %1804 = vmatpush1.bf16.msra.mxu0 0
    %1805 = vmatprep.subr.bf16.mxu0 0
    %1806 = vmatpush1.bf16.msra.mxu0 0
    %1807 = vmatprep.subr.bf16.mxu0 0
    %1808 = vmatpush1.bf16.msra.mxu0 0
    %1809 = vmatprep.subr.bf16.mxu0 %v209
    %1810 = vmatpush1.bf16.msra.mxu0 %v208
    %1811 = vmatprep.subr.bf16.mxu0 %v207
    %1812 = vmatpush1.bf16.msra.mxu0 %v206
    %1813 = vmatprep.subr.bf16.mxu0 %v205
    %1814 = vmatpush1.bf16.msra.mxu0 %v204
    %1815 = vmatprep.subr.bf16.mxu0 %v203
    %1816 = vmatpush1.bf16.msra.mxu0 %v202
    %1817 = vmatprep.subr.bf16.mxu0 0
    %1818 = vmatpush2.bf16.msra.mxu0 0
    %1819 = vmatprep.subr.bf16.mxu0 0
    %1820 = vmatpush2.bf16.msra.mxu0 0
    %1821 = vmatprep.subr.bf16.mxu0 0
    %1822 = vmatpush2.bf16.msra.mxu0 0
    %1823 = vmatprep.subr.bf16.mxu0 0
    %1824 = vmatpush2.bf16.msra.mxu0 0
    %1825 = vmatprep.subr.bf16.mxu0 0
    %1826 = vmatpush2.bf16.msra.mxu0 0
    %1827 = vmatprep.subr.bf16.mxu0 0
    %1828 = vmatpush2.bf16.msra.mxu0 0
    %1829 = vmatprep.subr.bf16.mxu0 0
    %1830 = vmatpush2.bf16.msra.mxu0 0
    %1831 = vmatprep.subr.bf16.mxu0 0
    %1832 = vmatpush2.bf16.msra.mxu0 0
    %1833 = vmatprep.mubr.bf16.mxu0 0
    %1834 = vmatmul.mubr.bf16.gmra.mxu0 %v1799
    %v1835 = vpop.f32.mrf.mxu0
    %v1836 = vadd.f32 0.0, %v1835
    %v1837 = vpop.f32.mrf.mxu0
    %v1838 = vadd.f32 0.0, %v1837
    %v1839 = vpop.f32.mrf.mxu0
    %v1840 = vpop.f32.mrf.mxu0
    %1841 = vdwg.mxu0
    %v1843 = vrot.slane %v1836, 2
    %v1845 = vadd.f32 %v143, %v1843
    %v1846 = vxor.u32 %v1845, 2147483648
    %v1847 = vmul.f32 %v1846, 1.442695
    %v1848 = vpow.pop %v1847
    %v1849 = vadd.f32 %v1848, 1.0
    %v1850 = vrcp.pop %v1849
    %v1851 = vmul.f32 1.0, %v1850
    %v1852 = vtanh.pop %v1845
    %v1854 = vrot.slane %v1752, 6
    %v1856 = vmul.f32 %v1851, %v1854
    %1858 = vrot.lane.b32.xlu0 %v1852, 64
    %v1859 = vpop.permute.xlu0 %1858
    %v1861 = vmul.f32 %v1851, %v1859
    %1863 = vrot.lane.b32.xlu0 %v1861, 32
    %v1864 = vpop.permute.xlu0 %1863
    %v1866 = vadd.f32 %v1856, %v1864
    %v1867 = vtanh.pop %v1866
    %1869 = vrot.lane.b32.xlu0 %v1867, 64
    %v1870 = vpop.permute.xlu0 %1869
    %v1872 = vmul.f32 %v1851, %v1870
    %v1873 = vadd.f32 %v1838, %v296
    %v1874 = vxor.u32 %v1873, 2147483648
    %v1875 = vmul.f32 %v1874, 1.442695
    %v1876 = vpow.pop %v1875
    %v1877 = vadd.f32 %v1876, 1.0
    %v1878 = vrcp.pop %v1877
    %v1879 = vmul.f32 1.0, %v1878
    %v1880 = vtanh.pop %v1873
    %v1881 = vmul.f32 %v1879, %v1777
    %1883 = vrot.lane.b32.xlu0 %v1880, 64
    %v1884 = vpop.permute.xlu0 %1883
    %v1886 = vmul.f32 %v1879, %v1884
    %1888 = vrot.lane.b32.xlu0 %v1886, 32
    %v1889 = vpop.permute.xlu0 %1888
    %v1891 = vadd.f32 %v1881, %v1889
    %v1892 = vtanh.pop %v1891
    %1894 = vrot.lane.b32.xlu0 %v1892, 64
    %v1895 = vpop.permute.xlu0 %1894
    %v1897 = vmul.f32 %v1879, %v1895
    %v1898 = vpack.c.bf16 %v1897, %v1897
    %v1899 = vpack.c.bf16 %v1872, %v1872
    %1901 = vrot.lane.b32.xlu0 %v1899, 32
    %v1902 = vpop.permute.xlu0 %1901
    %v1904 = vrot.slane %v1898, 5
    %1905 = vrot.lane.b32.xlu0 %v1904, 64
    %v1906 = vpop.permute.xlu0 %1905
    %v1909 = vsel %vm174, %v1902, %v1906
    %v1911 = vrot.slane %v1909, 3
    %v1913 = vsel %vm90, %v1911, 0
    %1915 = vmatprep.subr.bf16.mxu0 0
    %1916 = vmatpush1.bf16.msra.mxu0 0
    %1917 = vmatprep.subr.bf16.mxu0 0
    %1918 = vmatpush1.bf16.msra.mxu0 0
    %1919 = vmatprep.subr.bf16.mxu0 0
    %1920 = vmatpush1.bf16.msra.mxu0 0
    %1921 = vmatprep.subr.bf16.mxu0 0
    %1922 = vmatpush1.bf16.msra.mxu0 0
    %1923 = vmatprep.subr.bf16.mxu0 %v209
    %1924 = vmatpush1.bf16.msra.mxu0 %v208
    %1925 = vmatprep.subr.bf16.mxu0 %v207
    %1926 = vmatpush1.bf16.msra.mxu0 %v206
    %1927 = vmatprep.subr.bf16.mxu0 %v205
    %1928 = vmatpush1.bf16.msra.mxu0 %v204
    %1929 = vmatprep.subr.bf16.mxu0 %v203
    %1930 = vmatpush1.bf16.msra.mxu0 %v202
    %1931 = vmatprep.subr.bf16.mxu0 0
    %1932 = vmatpush2.bf16.msra.mxu0 0
    %1933 = vmatprep.subr.bf16.mxu0 0
    %1934 = vmatpush2.bf16.msra.mxu0 0
    %1935 = vmatprep.subr.bf16.mxu0 0
    %1936 = vmatpush2.bf16.msra.mxu0 0
    %1937 = vmatprep.subr.bf16.mxu0 0
    %1938 = vmatpush2.bf16.msra.mxu0 0
    %1939 = vmatprep.subr.bf16.mxu0 0
    %1940 = vmatpush2.bf16.msra.mxu0 0
    %1941 = vmatprep.subr.bf16.mxu0 0
    %1942 = vmatpush2.bf16.msra.mxu0 0
    %1943 = vmatprep.subr.bf16.mxu0 0
    %1944 = vmatpush2.bf16.msra.mxu0 0
    %1945 = vmatprep.subr.bf16.mxu0 0
    %1946 = vmatpush2.bf16.msra.mxu0 0
    %1947 = vmatprep.mubr.bf16.mxu0 0
    %1948 = vmatmul.mubr.bf16.gmra.mxu0 %v1913
    %v1949 = vpop.f32.mrf.mxu0
    %v1950 = vpop.f32.mrf.mxu0
    %v1951 = vadd.f32 0.0, %v1950
    %v1952 = vpop.f32.mrf.mxu0
    %v1953 = vpop.f32.mrf.mxu0
    %1954 = vdwg.mxu0
    %v1955 = vadd.f32 %v1951, %v296
    %v1956 = vxor.u32 %v1955, 2147483648
    %v1957 = vmul.f32 %v1956, 1.442695
    %v1958 = vpow.pop %v1957
    %v1959 = vadd.f32 %v1958, 1.0
    %v1960 = vrcp.pop %v1959
    %v1961 = vmul.f32 1.0, %v1960
    %v1962 = vtanh.pop %v1955
    %v1963 = vmul.f32 %v1961, %v1891
    %1965 = vrot.lane.b32.xlu0 %v1962, 64
    %v1966 = vpop.permute.xlu0 %1965
    %v1968 = vmul.f32 %v1961, %v1966
    %1970 = vrot.lane.b32.xlu0 %v1968, 32
    %v1971 = vpop.permute.xlu0 %1970
    %v1973 = vadd.f32 %v1963, %v1971
    %v1974 = vtanh.pop %v1973
    %1976 = vrot.lane.b32.xlu0 %v1974, 64
    %v1977 = vpop.permute.xlu0 %1976
    %v1979 = vmul.f32 %v1961, %v1977
    %v1980 = vld [vmem:[%s5] sm:$0xff]
    %v1981 = vld [vmem:[%s5 + $0x8] sm:$0xff]
    %v1982 = vld [vmem:[%s5 + $0x10] sm:$0xff]
    %v1983 = vld [vmem:[%s5 + $0x18] sm:$0xff]
    %v1984 = vld [vmem:[%s6] sm:$0x1]
    %v1986 = vlaneseq
    %v1987 = vshrl.u32 %v1986, 7
    %v1988 = vsub.s32 0, %v1987
    %v1989 = vrot.slane %v1984, %v1988
    %1992 = vrot.lane.b32.xlu0 %v1979, 32
    %v1993 = vpop.permute.xlu0 %1992
    %v1994 = vsel %vm174, %v1993, 0
    %1996 = vmatprep.subr.mxu0 0.0
    %1997 = vmatpush1.msra.mxu0 0.0
    %1998 = vmatprep.subr.mxu0 0.0
    %1999 = vmatpush1.msra.mxu0 0.0
    %2000 = vmatprep.subr.mxu0 0.0
    %2001 = vmatpush1.msra.mxu0 0.0
    %2002 = vmatprep.subr.mxu0 0.0
    %2003 = vmatpush1.msra.mxu0 0.0
    %2004 = vmatprep.subr.mxu0 0.0
    %2005 = vmatpush1.msra.mxu0 0.0
    %2006 = vmatprep.subr.mxu0 0.0
    %2007 = vmatpush1.msra.mxu0 0.0
    %2008 = vmatprep.subr.mxu0 0.0
    %2009 = vmatpush1.msra.mxu0 0.0
    %2010 = vmatprep.subr.mxu0 0.0
    %2011 = vmatpush1.msra.mxu0 0.0
    %2012 = vmatprep.subr.mxu0 0.0
    %2013 = vmatpush1.msra.mxu0 0.0
    %2014 = vmatprep.subr.mxu0 0.0
    %2015 = vmatpush1.msra.mxu0 0.0
    %2016 = vmatprep.subr.mxu0 0.0
    %2017 = vmatpush1.msra.mxu0 0.0
    %2018 = vmatprep.subr.mxu0 0.0
    %2019 = vmatpush1.msra.mxu0 0.0
    %2020 = vmatprep.subr.mxu0 0.0
    %2021 = vmatpush1.msra.mxu0 %v1983
    %2022 = vmatprep.subr.mxu0 0.0
    %2023 = vmatpush1.msra.mxu0 %v1982
    %2024 = vmatprep.subr.mxu0 0.0
    %2025 = vmatpush1.msra.mxu0 %v1981
    %2026 = vmatprep.subr.mxu0 0.0
    %2027 = vmatpush1.msra.mxu0 %v1980
    %2028 = vmatprep.subr.mxu0 0.0
    %2029 = vmatpush2.msra.mxu0 0.0
    %2030 = vmatprep.subr.mxu0 0.0
    %2031 = vmatpush2.msra.mxu0 0.0
    %2032 = vmatprep.subr.mxu0 0.0
    %2033 = vmatpush2.msra.mxu0 0.0
    %2034 = vmatprep.subr.mxu0 0.0
    %2035 = vmatpush2.msra.mxu0 0.0
    %2036 = vmatprep.subr.mxu0 0.0
    %2037 = vmatpush2.msra.mxu0 0.0
    %2038 = vmatprep.subr.mxu0 0.0
    %2039 = vmatpush2.msra.mxu0 0.0
    %2040 = vmatprep.subr.mxu0 0.0
    %2041 = vmatpush2.msra.mxu0 0.0
    %2042 = vmatprep.subr.mxu0 0.0
    %2043 = vmatpush2.msra.mxu0 0.0
    %2044 = vmatprep.subr.mxu0 0.0
    %2045 = vmatpush2.msra.mxu0 0.0
    %2046 = vmatprep.subr.mxu0 0.0
    %2047 = vmatpush2.msra.mxu0 0.0
    %2048 = vmatprep.subr.mxu0 0.0
    %2049 = vmatpush2.msra.mxu0 0.0
    %2050 = vmatprep.subr.mxu0 0.0
    %2051 = vmatpush2.msra.mxu0 0.0
    %2052 = vmatprep.subr.mxu0 0.0
    %2053 = vmatpush2.msra.mxu0 0.0
    %2054 = vmatprep.subr.mxu0 0.0
    %2055 = vmatpush2.msra.mxu0 0.0
    %2056 = vmatprep.subr.mxu0 0.0
    %2057 = vmatpush2.msra.mxu0 0.0
    %2058 = vmatprep.subr.mxu0 0.0
    %2059 = vmatpush2.msra.mxu0 0.0
    %2060 = vmatprep.mubr.f32.mxu0 0.0
    %2061 = vmatmul.mubr.f32.gmra.mxu0 %v1994
    %v2062 = vpop.f32.mrf.mxu0
    %v2063 = vadd.f32 %v1989, %v2062
    %v2064 = vpop.f32.mrf.mxu0
    %2065 = vdwg.mxu0
    %2066 = vst [vmem:[#allocation2] sm:$0x3] %v2063
    // Predicated region
    $region30: #{lstm_classify_forward.1} parent=1 // pred_check
      _
    $region31: #{lstm_classify_forward.1} parent=1 // pred_check_branch
      %2068 = sbr.rel (0) target = $region33
    $region32: #{lstm_classify_forward.1} parent=1 // pred_region
      %s2070 = ssub.s32 32, 32
      %2071 = vsyncadd [#allocation3], %s2070
      %s2073 = sshll.u32 [#allocation2], 4
      %s2074 = int_to_ptr.vmem [resolvable:$true] %s2073
      %2076 = dma.vmem_to_hbm [thread:$0]  %s2074, 32, %s7, [#allocation3]
    $region33: #{lstm_classify_forward.1} parent=1 // pred_fallthru
      _
    // Predicated region
    $region34: #{lstm_classify_forward.1} parent=1 // pred_check
      _
    $region35: #{lstm_classify_forward.1} parent=1 // pred_check_branch
      %2078 = sbr.rel (0) target = $region37
    $region36: #{lstm_classify_forward.1} parent=1 // pred_region
      %2079 = dma.done [#allocation3], 32
    $region37: #{lstm_classify_forward.1} parent=1 // pred_fallthru
      _
    %2080 = vsyncpa [#allocation3], 1

</llo_original>
